<compile_context>
chip_gen: v7x
topology: tpu7x:2x2x1
jax: 0.10.0
libtpu: 0.0.40
codegen_flags: <defaults>
</compile_context>

<pallas_src>
import functools
import math

import jax
import jax.numpy as jnp
from jax.experimental import pallas as pl
from jax.experimental.pallas import tpu as pltpu

# ---------------- config ----------------
S, B, H = 8, 2, 32          # seq, batch, hidden
NH, NKV = 4, 2              # num query heads, num kv heads (multi-query attention)
D = H // NH                 # head_dim = 8
FFN = 64                    # ffn_hidden_size
ROT = D // 2                # rotary dims (rope_cache last-2 dim = ROT//2)
EPS = 1e-5
W_QKV = H + 2 * NKV * D     # fused qkv width (q | k | v) = 64
NEG_BIAS = -1e9             # finite "masked" additive bias (exp underflows to exactly 0)


# ---------------- fused Pallas kernel: one full layer for one batch element ----------------
def batgpt_layer_kernel(x_ref, ln1_ref, ln2_ref, wqkv_ref, bqkv_ref,
                        cos_ref, sine_ref, sino_ref, mask_ref,
                        wo_ref, w1a_ref, w1b_ref, w2_ref,
                        out_ref, *, nh, nkv, d, eps):
    f32 = jnp.float32
    x = x_ref[...].astype(f32)                                        # (S, H)

    # ---- input RMSNorm ----
    var = jnp.mean(x * x, axis=-1, keepdims=True)
    ln1 = (x * jax.lax.rsqrt(var + eps)) * ln1_ref[...].astype(f32)

    # ---- fused QKV projection (+bias); 1/sqrt(D) already folded into the q columns ----
    qkv = jnp.dot(ln1, wqkv_ref[...].astype(f32),
                  preferred_element_type=f32) + bqkv_ref[...].astype(f32)   # (S, W_QKV)

    # ---- rotary embedding, fused: pair-swap via two XLU lane rolls + precomputed tables.
    # cos is 1 / sin tables are 0 on non-rotary and V columns, so wrap-around lanes and
    # pass-through dims are automatically untouched.
    w = qkv.shape[-1]
    qkv = (qkv * cos_ref[...].astype(f32)
           + pltpu.roll(qkv, shift=w - 1, axis=1) * sine_ref[...].astype(f32)   # value from lane c+1
           + pltpu.roll(qkv, shift=1, axis=1) * sino_ref[...].astype(f32))      # value from lane c-1

    hq = nh * d
    rep = nh // nkv
    bias = mask_ref[...].astype(f32)                                  # (S, S) causal additive bias

    # ---- multi-query causal self-attention (per-head, static unroll; kv shared by index) ----
    ctx_parts = []
    for head in range(nh):
        kvh = head // rep                                             # MQA: shared kv head
        q_h = qkv[:, head * d:(head + 1) * d]                         # (S, D), already scaled
        k_h = qkv[:, hq + kvh * d: hq + (kvh + 1) * d]
        v_h = qkv[:, hq + nkv * d + kvh * d: hq + nkv * d + (kvh + 1) * d]
        s = jax.lax.dot_general(q_h, k_h, (((1,), (1,)), ((), ())),
                                preferred_element_type=f32) + bias    # (S, S)
        s_max = jnp.max(s, axis=-1, keepdims=True)
        p = jnp.exp(s - s_max)
        denom = jnp.sum(p, axis=-1, keepdims=True)
        p = p * pl.reciprocal(denom, approx=True)                     # EUP slot
        ctx_parts.append(jnp.dot(p, v_h, preferred_element_type=f32)) # (S, D)

    # single K=H output projection instead of 4 per-head K=D matmuls
    ctx = jnp.concatenate(ctx_parts, axis=-1)                         # (S, H)
    attn_out = jnp.dot(ctx, wo_ref[...].astype(f32), preferred_element_type=f32)

    # residual (hidden_dropout = 0.0 -> identity)
    ln_in = x + attn_out

    # ---- post-attention RMSNorm ----
    var2 = jnp.mean(ln_in * ln_in, axis=-1, keepdims=True)
    ln2 = (ln_in * jax.lax.rsqrt(var2 + eps)) * ln2_ref[...].astype(f32)

    # ---- SwiGLU MLP: gate/up weights pre-split -> two lane-dense matmuls ----
    a = jnp.dot(ln2, w1a_ref[...].astype(f32), preferred_element_type=f32)
    g = jnp.dot(ln2, w1b_ref[...].astype(f32), preferred_element_type=f32)
    act = (a * jax.nn.sigmoid(a)) * g
    mlp = jnp.dot(act, w2_ref[...].astype(f32), preferred_element_type=f32)

    # single lane-contiguous store: [ layer output | post-rope k | v ]
    out_ref[...] = jnp.concatenate([ln_in + mlp, qkv[:, hq:]], axis=-1).astype(out_ref.dtype)
    # TODO(synk): non-None attention_mask, nonzero training-mode dropout, and prefilled
    # kv_cache concatenation are not wired up (the example config uses attention_mask=None,
    # p=0.0, kv_cache=None, matching the causal SDPA path of the reference module).
    # TODO(synk): for long sequences, replace the (S,S) score/prob tiles with a KV-block grid
    # (flash-attention accumulator + pl.when init/finalize) sized for v7x's 64 MiB VMEM.


def batgpt_layer_pallas(x, prep, rope_tabs, mask_bias):
    """x: (S, B, H). Returns (out (S,B,H), kv_cache=(k,v) each (S,B,NKV,D))."""
    Sx, Bx, Hx = x.shape
    Wq = Hx + 2 * NKV * D
    xb = jnp.transpose(x, (1, 0, 2))                       # (B, S, H) — wrapper-side plumbing
    cos_t, sin_e_t, sin_o_t = rope_tabs
    kernel = functools.partial(batgpt_layer_kernel, nh=NH, nkv=NKV, d=D, eps=EPS)

    grid_spec = pltpu.PrefetchScalarGridSpec(
        num_scalar_prefetch=0,
        grid=(Bx,),                                        # independent batches -> parallel axis
        in_specs=[
            pl.BlockSpec((None, Sx, Hx), lambda b: (b, 0, 0)),   # x (per-batch block)
            pl.BlockSpec((1, Hx), lambda b: (0, 0)),             # ln1_w
            pl.BlockSpec((1, Hx), lambda b: (0, 0)),             # ln2_w
            pl.BlockSpec((Hx, Wq), lambda b: (0, 0)),            # wqkv_t (q pre-scaled)
            pl.BlockSpec((1, Wq), lambda b: (0, 0)),             # bqkv
            pl.BlockSpec((Sx, Wq), lambda b: (0, 0)),            # cos table
            pl.BlockSpec((Sx, Wq), lambda b: (0, 0)),            # -sin (even lanes) table
            pl.BlockSpec((Sx, Wq), lambda b: (0, 0)),            # +sin (odd lanes) table
            pl.BlockSpec((Sx, Sx), lambda b: (0, 0)),            # causal additive bias
            pl.BlockSpec((Hx, Hx), lambda b: (0, 0)),            # wo_t
            pl.BlockSpec((Hx, FFN), lambda b: (0, 0)),           # w1 gate half
            pl.BlockSpec((Hx, FFN), lambda b: (0, 0)),           # w1 up half
            pl.BlockSpec((FFN, Hx), lambda b: (0, 0)),           # w2_t
        ],
        out_specs=pl.BlockSpec((None, Sx, Wq), lambda b: (b, 0, 0)),
    )

    combined = pl.pallas_call(
        kernel,
        grid_spec=grid_spec,
        out_shape=jax.ShapeDtypeStruct((Bx, Sx, Wq), x.dtype),
        compiler_params=pltpu.CompilerParams(dimension_semantics=("parallel",)),
    )(xb, prep["ln1_w"], prep["ln2_w"], prep["wqkv_t"], prep["bqkv"],
      cos_t, sin_e_t, sin_o_t, mask_bias,
      prep["wo_t"], prep["w1a_t"], prep["w1b_t"], prep["w2_t"])

    # wrapper-side split of the single lane-dense slab (free layout plumbing)
    out = jnp.transpose(combined[:, :, :Hx], (1, 0, 2))               # (S, B, H)
    kvb = combined[:, :, Hx:]
    k = jnp.transpose(kvb[:, :, :NKV * D].reshape(Bx, Sx, NKV, D), (1, 0, 2, 3))
    v = jnp.transpose(kvb[:, :, NKV * D:].reshape(Bx, Sx, NKV, D), (1, 0, 2, 3))
    return out, (k, v)


# ---------------- one-time weight / table preparation (outside the forward) ----------------
def prepare_params(params):
    scale = 1.0 / math.sqrt(D)
    # fold the 1/sqrt(head_dim) score scale into the Q projection (rope is linear -> commutes)
    wqkv_t = jnp.concatenate([params["wq"].T * scale, params["wk"].T, params["wv"].T], axis=1)
    bqkv = jnp.concatenate([params["bq"] * scale, params["bk"], params["bv"]], axis=1)
    w1_t = params["w1"].T
    return {
        "ln1_w": params["ln1_w"], "ln2_w": params["ln2_w"],
        "wqkv_t": wqkv_t, "bqkv": bqkv,
        "wo_t": params["wo"].T,
        "w1a_t": w1_t[:, :FFN], "w1b_t": w1_t[:, FFN:],
        "w2_t": params["w2"].T,
    }


def make_rope_cache(seq_len, rot_dim, dtype=jnp.float32):
    half = rot_dim // 2
    inv_freq = 1.0 / (10000.0 ** (jnp.arange(0, half, dtype=jnp.float32) * 2.0 / rot_dim))
    pos = jnp.arange(seq_len, dtype=jnp.float32)
    ang = jnp.outer(pos, inv_freq)                                    # (S, half)
    cache = jnp.stack([jnp.cos(ang), jnp.sin(ang)], axis=-1)          # (S, half, 2)
    return cache[:, None, :, :].astype(dtype)                         # (S, 1, half, 2)


def rope_tables_from_cache(rope_cache, seq, n_head, n_kv, head_dim):
    """Expand the (S,1,rot/2,2) rope cache into per-(seq-row, qkv-column) tables:
       cos (1 on pass-through / V columns), -sin on even rotary columns, +sin on odd ones."""
    rot_half = rope_cache.shape[-2]
    rot_dim = rot_half * 2
    cos = rope_cache[:seq, 0, :, 0]                                   # (S, rot/2)
    sin = rope_cache[:seq, 0, :, 1]
    dt = cos.dtype
    pass_w = head_dim - rot_dim
    cos_head = jnp.concatenate(
        [jnp.repeat(cos, 2, axis=1), jnp.ones((seq, pass_w), dtype=dt)], axis=1)
    sin_rep = jnp.repeat(sin, 2, axis=1)                              # (S, rot_dim)
    even = jnp.tile(jnp.array([1.0, 0.0], dtype=dt), rot_half)
    odd = jnp.tile(jnp.array([0.0, 1.0], dtype=dt), rot_half)
    sin_e_head = jnp.concatenate([-sin_rep * even, jnp.zeros((seq, pass_w), dtype=dt)], axis=1)
    sin_o_head = jnp.concatenate([sin_rep * odd, jnp.zeros((seq, pass_w), dtype=dt)], axis=1)
    n_qk = n_head + n_kv
    v_w = n_kv * head_dim
    cos_full = jnp.concatenate(
        [jnp.tile(cos_head, (1, n_qk)), jnp.ones((seq, v_w), dtype=dt)], axis=1)
    sin_e_full = jnp.concatenate(
        [jnp.tile(sin_e_head, (1, n_qk)), jnp.zeros((seq, v_w), dtype=dt)], axis=1)
    sin_o_full = jnp.concatenate(
        [jnp.tile(sin_o_head, (1, n_qk)), jnp.zeros((seq, v_w), dtype=dt)], axis=1)
    return cos_full, sin_e_full, sin_o_full


def make_causal_bias(seq, dtype=jnp.float32):
    tri = jnp.tril(jnp.ones((seq, seq), dtype=bool))
    return jnp.where(tri, 0.0, NEG_BIAS).astype(dtype)


# ---------------- pure-JAX reference for verification ----------------
def apply_rotary_pos_emb(x, rope_cache):
    sq, b, np_, hn = x.shape
    rot_dim = rope_cache.shape[-2] * 2
    x_rot, x_pass = x[..., :rot_dim], x[..., rot_dim:]
    rc = rope_cache[:sq].reshape(sq, -1, 1, rot_dim // 2, 2)
    xs = x_rot.reshape(sq, -1, np_, rot_dim // 2, 2)
    o0 = xs[..., 0] * rc[..., 0] - xs[..., 1] * rc[..., 1]
    o1 = xs[..., 1] * rc[..., 0] + xs[..., 0] * rc[..., 1]
    out = jnp.stack([o0, o1], axis=-1).reshape(sq, b, np_, rot_dim)
    return jnp.concatenate([out, x_pass], axis=-1)


def reference_layer(x, params, rope_cache):
    Sx, Bx, Hx = x.shape

    def rms(h, w):
        var = jnp.mean(h.astype(jnp.float32) ** 2, -1, keepdims=True)
        return w.reshape(-1) * (h * jax.lax.rsqrt(var + EPS))

    residual = x
    ln1 = rms(x, params["ln1_w"])
    q = ln1 @ params["wq"].T + params["bq"].reshape(-1)
    k = ln1 @ params["wk"].T + params["bk"].reshape(-1)
    v = ln1 @ params["wv"].T + params["bv"].reshape(-1)
    q = q.reshape(Sx, Bx, NH, D)
    k = k.reshape(Sx, Bx, NKV, D)
    v = v.reshape(Sx, Bx, NKV, D)
    q = apply_rotary_pos_emb(q, rope_cache)
    k = apply_rotary_pos_emb(k, rope_cache)
    kv_cache = (k, v)
    rep = NH // NKV
    k = jnp.repeat(k, rep, axis=2)
    v = jnp.repeat(v, rep, axis=2)
    qb, kb, vb = [jnp.transpose(t, (1, 2, 0, 3)) for t in (q, k, v)]
    s = jnp.einsum("bhqd,bhkd->bhqk", qb, kb) / math.sqrt(D)
    mask = jnp.tril(jnp.ones((Sx, Sx), dtype=bool))
    s = jnp.where(mask, s, -jnp.inf)
    p = jax.nn.softmax(s, axis=-1)
    ctx = jnp.einsum("bhqk,bhkd->bhqd", p, vb)
    ctx = jnp.transpose(ctx, (2, 0, 1, 3)).reshape(Sx, Bx, Hx)
    attn_out = ctx @ params["wo"].T
    ln_in = residual + attn_out
    ln2 = rms(ln_in, params["ln2_w"])
    h4 = ln2 @ params["w1"].T
    a, g = h4[..., :FFN], h4[..., FFN:]
    mlp = (jax.nn.silu(a) * g) @ params["w2"].T
    return ln_in + mlp, kv_cache


# ---------------- main ----------------
if __name__ == "__main__":
    key = jax.random.PRNGKey(0)
    ks = jax.random.split(key, 12)
    params = {
        "ln1_w": (1.0 + 0.1 * jax.random.normal(ks[0], (1, H))).astype(jnp.float32),
        "ln2_w": (1.0 + 0.1 * jax.random.normal(ks[1], (1, H))).astype(jnp.float32),
        # torch nn.Linear weight layout: (out_features, in_features)
        "wq": 0.05 * jax.random.normal(ks[2], (H, H), dtype=jnp.float32),
        "bq": 0.01 * jax.random.normal(ks[3], (1, H), dtype=jnp.float32),
        "wk": 0.05 * jax.random.normal(ks[4], (NKV * D, H), dtype=jnp.float32),
        "bk": 0.01 * jax.random.normal(ks[5], (1, NKV * D), dtype=jnp.float32),
        "wv": 0.05 * jax.random.normal(ks[6], (NKV * D, H), dtype=jnp.float32),
        "bv": 0.01 * jax.random.normal(ks[7], (1, NKV * D), dtype=jnp.float32),
        "wo": 0.05 * jax.random.normal(ks[8], (H, H), dtype=jnp.float32),
        "w1": 0.05 * jax.random.normal(ks[9], (2 * FFN, H), dtype=jnp.float32),
        "w2": 0.05 * jax.random.normal(ks[10], (H, FFN), dtype=jnp.float32),
    }
    x = jax.random.normal(ks[11], (S, B, H), dtype=jnp.float32)
    rope_cache = make_rope_cache(S, ROT)

    # one-time weight fusion / transposition, rotary-table expansion, and mask precompute
    prep = prepare_params(params)
    rope_tabs = rope_tables_from_cache(rope_cache, S, NH, NKV, D)
    mask_bias = make_causal_bias(S)

    out, (k_cache, v_cache) = batgpt_layer_pallas(x, prep, rope_tabs, mask_bias)
    out = jax.block_until_ready(out)

    ref, (k_ref, v_ref) = reference_layer(x, params, rope_cache)
    err = float(jnp.max(jnp.abs(out - ref)))
    # tolerance on the layer output is 2e-3 (instead of 1e-4) solely because the softmax
    # denominator uses the EUP approximate reciprocal per the perf review; the kv cache
    # takes no approximate path and is checked at 1e-4.
    assert jnp.allclose(out, ref, atol=2e-3, rtol=2e-3), f"max abs err = {err}"
    assert jnp.allclose(k_cache, k_ref, atol=1e-4, rtol=1e-4), "kv cache (k) mismatch"
    assert jnp.allclose(v_cache, v_ref, atol=1e-4, rtol=1e-4), "kv cache (v) mismatch"
    print("KERNEL_OK")
</pallas_src>

<mosaic_0001>
module attributes {stable_mosaic.version = 11 : i64} {
  func.func @batgpt_layer_kernel(%arg0: i32, %arg1: memref<1x8x32xf32, #tpu.memory_space<vmem>>, %arg2: memref<1x32xf32, #tpu.memory_space<vmem>>, %arg3: memref<1x32xf32, #tpu.memory_space<vmem>>, %arg4: memref<32x64xf32, #tpu.memory_space<vmem>>, %arg5: memref<1x64xf32, #tpu.memory_space<vmem>>, %arg6: memref<8x64xf32, #tpu.memory_space<vmem>>, %arg7: memref<8x64xf32, #tpu.memory_space<vmem>>, %arg8: memref<8x64xf32, #tpu.memory_space<vmem>>, %arg9: memref<8x8xf32, #tpu.memory_space<vmem>>, %arg10: memref<32x32xf32, #tpu.memory_space<vmem>>, %arg11: memref<32x64xf32, #tpu.memory_space<vmem>>, %arg12: memref<32x64xf32, #tpu.memory_space<vmem>>, %arg13: memref<64x32xf32, #tpu.memory_space<vmem>>, %arg14: memref<1x8x64xf32, #tpu.memory_space<vmem>>) attributes {dimension_semantics = [#tpu.dimension_semantics<parallel>], iteration_bounds = array<i64: 2>, scalar_prefetch = 0 : i64, scratch_operands = 0 : i64, tpu.core_type = #tpu.core_type<tc>, window_params = [{transform_indices = @transform_0, window_bounds = array<i64: 1, 8, 32>}, {pipeline_mode = #tpu.pipeline_mode<synchronous>, transform_indices = @transform_1, window_bounds = array<i64: 1, 32>}, {pipeline_mode = #tpu.pipeline_mode<synchronous>, transform_indices = @transform_2, window_bounds = array<i64: 1, 32>}, {pipeline_mode = #tpu.pipeline_mode<synchronous>, transform_indices = @transform_3, window_bounds = array<i64: 32, 64>}, {pipeline_mode = #tpu.pipeline_mode<synchronous>, transform_indices = @transform_4, window_bounds = array<i64: 1, 64>}, {pipeline_mode = #tpu.pipeline_mode<synchronous>, transform_indices = @transform_5, window_bounds = array<i64: 8, 64>}, {pipeline_mode = #tpu.pipeline_mode<synchronous>, transform_indices = @transform_6, window_bounds = array<i64: 8, 64>}, {pipeline_mode = #tpu.pipeline_mode<synchronous>, transform_indices = @transform_7, window_bounds = array<i64: 8, 64>}, {pipeline_mode = #tpu.pipeline_mode<synchronous>, transform_indices = @transform_8, window_bounds = array<i64: 8, 8>}, {pipeline_mode = #tpu.pipeline_mode<synchronous>, transform_indices = @transform_9, window_bounds = array<i64: 32, 32>}, {pipeline_mode = #tpu.pipeline_mode<synchronous>, transform_indices = @transform_10, window_bounds = array<i64: 32, 64>}, {pipeline_mode = #tpu.pipeline_mode<synchronous>, transform_indices = @transform_11, window_bounds = array<i64: 32, 64>}, {pipeline_mode = #tpu.pipeline_mode<synchronous>, transform_indices = @transform_12, window_bounds = array<i64: 64, 32>}, {transform_indices = @transform_13, window_bounds = array<i64: 1, 8, 64>}]} {
    %c0 = arith.constant 0 : index
    %c0_0 = arith.constant 0 : index
    %c0_1 = arith.constant 0 : index
    %0 = vector.load %arg1[%c0, %c0_0, %c0_1] : memref<1x8x32xf32, #tpu.memory_space<vmem>>, vector<1x8x32xf32>
    %1 = vector.shape_cast %0 : vector<1x8x32xf32> to vector<8x32xf32>
    %2 = arith.mulf %1, %1 : vector<8x32xf32>
    %cst = arith.constant dense<0.000000e+00> : vector<8xf32>
    %3 = vector.multi_reduction <add>, %2, %cst [1] : vector<8x32xf32> to vector<8xf32>
    %4 = vector.shape_cast %3 : vector<8xf32> to vector<8x1xf32>
    %cst_2 = arith.constant 3.200000e+01 : f32
    %5 = vector.broadcast %cst_2 : f32 to vector<8x1xf32>
    %6 = arith.divf %4, %5 : vector<8x1xf32>
    %cst_3 = arith.constant 9.99999974E-6 : f32
    %7 = vector.broadcast %cst_3 : f32 to vector<8x1xf32>
    %8 = arith.addf %6, %7 : vector<8x1xf32>
    %9 = math.rsqrt %8 : vector<8x1xf32>
    %10 = vector.broadcast %9 : vector<8x1xf32> to vector<8x32xf32>
    %11 = arith.mulf %1, %10 : vector<8x32xf32>
    %c0_4 = arith.constant 0 : index
    %c0_5 = arith.constant 0 : index
    %12 = vector.load %arg2[%c0_4, %c0_5] : memref<1x32xf32, #tpu.memory_space<vmem>>, vector<1x32xf32>
    %13 = vector.broadcast %12 : vector<1x32xf32> to vector<8x32xf32>
    %14 = arith.mulf %11, %13 : vector<8x32xf32>
    %c0_6 = arith.constant 0 : index
    %c0_7 = arith.constant 0 : index
    %15 = vector.load %arg4[%c0_6, %c0_7] : memref<32x64xf32, #tpu.memory_space<vmem>>, vector<32x64xf32>
    %cst_8 = arith.constant dense<0.000000e+00> : vector<8x64xf32>
    %16 = tpu.matmul %14, %15, %cst_8 {dimension_numbers = #tpu.dot_dimension_numbers<[1], [0], [0], [1], [0, 0, 1, 1], [], []>} : vector<8x32xf32>, vector<32x64xf32>, vector<8x64xf32> -> vector<8x64xf32>
    %c0_9 = arith.constant 0 : index
    %c0_10 = arith.constant 0 : index
    %17 = vector.load %arg5[%c0_9, %c0_10] : memref<1x64xf32, #tpu.memory_space<vmem>>, vector<1x64xf32>
    %18 = vector.broadcast %17 : vector<1x64xf32> to vector<8x64xf32>
    %19 = arith.addf %16, %18 : vector<8x64xf32>
    %c0_11 = arith.constant 0 : index
    %c0_12 = arith.constant 0 : index
    %20 = vector.load %arg6[%c0_11, %c0_12] : memref<8x64xf32, #tpu.memory_space<vmem>>, vector<8x64xf32>
    %21 = arith.mulf %19, %20 : vector<8x64xf32>
    %c63_i32 = arith.constant 63 : i32
    %22 = tpu.dynamic_rotate %19 by %c63_i32 dim 1 : vector<8x64xf32>, i32 -> vector<8x64xf32>
    %c0_13 = arith.constant 0 : index
    %c0_14 = arith.constant 0 : index
    %23 = vector.load %arg7[%c0_13, %c0_14] : memref<8x64xf32, #tpu.memory_space<vmem>>, vector<8x64xf32>
    %24 = arith.mulf %22, %23 : vector<8x64xf32>
    %25 = arith.addf %21, %24 : vector<8x64xf32>
    %c1_i32 = arith.constant 1 : i32
    %26 = tpu.dynamic_rotate %19 by %c1_i32 dim 1 : vector<8x64xf32>, i32 -> vector<8x64xf32>
    %c0_15 = arith.constant 0 : index
    %c0_16 = arith.constant 0 : index
    %27 = vector.load %arg8[%c0_15, %c0_16] : memref<8x64xf32, #tpu.memory_space<vmem>>, vector<8x64xf32>
    %28 = arith.mulf %26, %27 : vector<8x64xf32>
    %29 = arith.addf %25, %28 : vector<8x64xf32>
    %c0_17 = arith.constant 0 : index
    %c0_18 = arith.constant 0 : index
    %30 = vector.load %arg9[%c0_17, %c0_18] : memref<8x8xf32, #tpu.memory_space<vmem>>, vector<8x8xf32>
    %31 = vector.extract_strided_slice %29 {offsets = [0, 0], sizes = [8, 8], strides = [1, 1]} : vector<8x64xf32> to vector<8x8xf32>
    %32 = vector.extract_strided_slice %29 {offsets = [0, 32], sizes = [8, 8], strides = [1, 1]} : vector<8x64xf32> to vector<8x8xf32>
    %33 = vector.extract_strided_slice %29 {offsets = [0, 48], sizes = [8, 8], strides = [1, 1]} : vector<8x64xf32> to vector<8x8xf32>
    %cst_19 = arith.constant dense<0.000000e+00> : vector<8x8xf32>
    %34 = tpu.matmul %31, %32, %cst_19 {dimension_numbers = #tpu.dot_dimension_numbers<[1], [1], [0], [0], [0, 0, 1, 0], [], []>} : vector<8x8xf32>, vector<8x8xf32>, vector<8x8xf32> -> vector<8x8xf32>
    %35 = arith.addf %34, %30 : vector<8x8xf32>
    %cst_20 = arith.constant dense<0xFF800000> : vector<8xf32>
    %36 = vector.multi_reduction <maximumf>, %35, %cst_20 [1] : vector<8x8xf32> to vector<8xf32>
    %37 = vector.shape_cast %36 : vector<8xf32> to vector<8x1xf32>
    %38 = vector.broadcast %37 : vector<8x1xf32> to vector<8x8xf32>
    %39 = arith.subf %35, %38 : vector<8x8xf32>
    %40 = math.exp %39 : vector<8x8xf32>
    %cst_21 = arith.constant dense<0.000000e+00> : vector<8xf32>
    %41 = vector.multi_reduction <add>, %40, %cst_21 [1] : vector<8x8xf32> to vector<8xf32>
    %42 = vector.shape_cast %41 : vector<8xf32> to vector<8x1xf32>
    %43 = tpu.reciprocal %42 {approx = true} : vector<8x1xf32> -> vector<8x1xf32>
    %44 = vector.broadcast %43 : vector<8x1xf32> to vector<8x8xf32>
    %45 = arith.mulf %40, %44 : vector<8x8xf32>
    %cst_22 = arith.constant dense<0.000000e+00> : vector<8x8xf32>
    %46 = tpu.matmul %45, %33, %cst_22 {dimension_numbers = #tpu.dot_dimension_numbers<[1], [0], [0], [1], [0, 0, 1, 1], [], []>} : vector<8x8xf32>, vector<8x8xf32>, vector<8x8xf32> -> vector<8x8xf32>
    %47 = vector.extract_strided_slice %29 {offsets = [0, 8], sizes = [8, 8], strides = [1, 1]} : vector<8x64xf32> to vector<8x8xf32>
    %48 = vector.extract_strided_slice %29 {offsets = [0, 32], sizes = [8, 8], strides = [1, 1]} : vector<8x64xf32> to vector<8x8xf32>
    %49 = vector.extract_strided_slice %29 {offsets = [0, 48], sizes = [8, 8], strides = [1, 1]} : vector<8x64xf32> to vector<8x8xf32>
    %cst_23 = arith.constant dense<0.000000e+00> : vector<8x8xf32>
    %50 = tpu.matmul %47, %48, %cst_23 {dimension_numbers = #tpu.dot_dimension_numbers<[1], [1], [0], [0], [0, 0, 1, 0], [], []>} : vector<8x8xf32>, vector<8x8xf32>, vector<8x8xf32> -> vector<8x8xf32>
    %51 = arith.addf %50, %30 : vector<8x8xf32>
    %cst_24 = arith.constant dense<0xFF800000> : vector<8xf32>
    %52 = vector.multi_reduction <maximumf>, %51, %cst_24 [1] : vector<8x8xf32> to vector<8xf32>
    %53 = vector.shape_cast %52 : vector<8xf32> to vector<8x1xf32>
    %54 = vector.broadcast %53 : vector<8x1xf32> to vector<8x8xf32>
    %55 = arith.subf %51, %54 : vector<8x8xf32>
    %56 = math.exp %55 : vector<8x8xf32>
    %cst_25 = arith.constant dense<0.000000e+00> : vector<8xf32>
    %57 = vector.multi_reduction <add>, %56, %cst_25 [1] : vector<8x8xf32> to vector<8xf32>
    %58 = vector.shape_cast %57 : vector<8xf32> to vector<8x1xf32>
    %59 = tpu.reciprocal %58 {approx = true} : vector<8x1xf32> -> vector<8x1xf32>
    %60 = vector.broadcast %59 : vector<8x1xf32> to vector<8x8xf32>
    %61 = arith.mulf %56, %60 : vector<8x8xf32>
    %cst_26 = arith.constant dense<0.000000e+00> : vector<8x8xf32>
    %62 = tpu.matmul %61, %49, %cst_26 {dimension_numbers = #tpu.dot_dimension_numbers<[1], [0], [0], [1], [0, 0, 1, 1], [], []>} : vector<8x8xf32>, vector<8x8xf32>, vector<8x8xf32> -> vector<8x8xf32>
    %63 = vector.extract_strided_slice %29 {offsets = [0, 16], sizes = [8, 8], strides = [1, 1]} : vector<8x64xf32> to vector<8x8xf32>
    %64 = vector.extract_strided_slice %29 {offsets = [0, 40], sizes = [8, 8], strides = [1, 1]} : vector<8x64xf32> to vector<8x8xf32>
    %65 = vector.extract_strided_slice %29 {offsets = [0, 56], sizes = [8, 8], strides = [1, 1]} : vector<8x64xf32> to vector<8x8xf32>
    %cst_27 = arith.constant dense<0.000000e+00> : vector<8x8xf32>
    %66 = tpu.matmul %63, %64, %cst_27 {dimension_numbers = #tpu.dot_dimension_numbers<[1], [1], [0], [0], [0, 0, 1, 0], [], []>} : vector<8x8xf32>, vector<8x8xf32>, vector<8x8xf32> -> vector<8x8xf32>
    %67 = arith.addf %66, %30 : vector<8x8xf32>
    %cst_28 = arith.constant dense<0xFF800000> : vector<8xf32>
    %68 = vector.multi_reduction <maximumf>, %67, %cst_28 [1] : vector<8x8xf32> to vector<8xf32>
    %69 = vector.shape_cast %68 : vector<8xf32> to vector<8x1xf32>
    %70 = vector.broadcast %69 : vector<8x1xf32> to vector<8x8xf32>
    %71 = arith.subf %67, %70 : vector<8x8xf32>
    %72 = math.exp %71 : vector<8x8xf32>
    %cst_29 = arith.constant dense<0.000000e+00> : vector<8xf32>
    %73 = vector.multi_reduction <add>, %72, %cst_29 [1] : vector<8x8xf32> to vector<8xf32>
    %74 = vector.shape_cast %73 : vector<8xf32> to vector<8x1xf32>
    %75 = tpu.reciprocal %74 {approx = true} : vector<8x1xf32> -> vector<8x1xf32>
    %76 = vector.broadcast %75 : vector<8x1xf32> to vector<8x8xf32>
    %77 = arith.mulf %72, %76 : vector<8x8xf32>
    %cst_30 = arith.constant dense<0.000000e+00> : vector<8x8xf32>
    %78 = tpu.matmul %77, %65, %cst_30 {dimension_numbers = #tpu.dot_dimension_numbers<[1], [0], [0], [1], [0, 0, 1, 1], [], []>} : vector<8x8xf32>, vector<8x8xf32>, vector<8x8xf32> -> vector<8x8xf32>
    %79 = vector.extract_strided_slice %29 {offsets = [0, 24], sizes = [8, 8], strides = [1, 1]} : vector<8x64xf32> to vector<8x8xf32>
    %80 = vector.extract_strided_slice %29 {offsets = [0, 40], sizes = [8, 8], strides = [1, 1]} : vector<8x64xf32> to vector<8x8xf32>
    %81 = vector.extract_strided_slice %29 {offsets = [0, 56], sizes = [8, 8], strides = [1, 1]} : vector<8x64xf32> to vector<8x8xf32>
    %cst_31 = arith.constant dense<0.000000e+00> : vector<8x8xf32>
    %82 = tpu.matmul %79, %80, %cst_31 {dimension_numbers = #tpu.dot_dimension_numbers<[1], [1], [0], [0], [0, 0, 1, 0], [], []>} : vector<8x8xf32>, vector<8x8xf32>, vector<8x8xf32> -> vector<8x8xf32>
    %83 = arith.addf %82, %30 : vector<8x8xf32>
    %cst_32 = arith.constant dense<0xFF800000> : vector<8xf32>
    %84 = vector.multi_reduction <maximumf>, %83, %cst_32 [1] : vector<8x8xf32> to vector<8xf32>
    %85 = vector.shape_cast %84 : vector<8xf32> to vector<8x1xf32>
    %86 = vector.broadcast %85 : vector<8x1xf32> to vector<8x8xf32>
    %87 = arith.subf %83, %86 : vector<8x8xf32>
    %88 = math.exp %87 : vector<8x8xf32>
    %cst_33 = arith.constant dense<0.000000e+00> : vector<8xf32>
    %89 = vector.multi_reduction <add>, %88, %cst_33 [1] : vector<8x8xf32> to vector<8xf32>
    %90 = vector.shape_cast %89 : vector<8xf32> to vector<8x1xf32>
    %91 = tpu.reciprocal %90 {approx = true} : vector<8x1xf32> -> vector<8x1xf32>
    %92 = vector.broadcast %91 : vector<8x1xf32> to vector<8x8xf32>
    %93 = arith.mulf %88, %92 : vector<8x8xf32>
    %cst_34 = arith.constant dense<0.000000e+00> : vector<8x8xf32>
    %94 = tpu.matmul %93, %81, %cst_34 {dimension_numbers = #tpu.dot_dimension_numbers<[1], [0], [0], [1], [0, 0, 1, 1], [], []>} : vector<8x8xf32>, vector<8x8xf32>, vector<8x8xf32> -> vector<8x8xf32>
    %95 = tpu.concatenate %46, %62, %78, %94 in 1 : vector<8x8xf32>, vector<8x8xf32>, vector<8x8xf32>, vector<8x8xf32> -> vector<8x32xf32>
    %c0_35 = arith.constant 0 : index
    %c0_36 = arith.constant 0 : index
    %96 = vector.load %arg10[%c0_35, %c0_36] : memref<32x32xf32, #tpu.memory_space<vmem>>, vector<32x32xf32>
    %cst_37 = arith.constant dense<0.000000e+00> : vector<8x32xf32>
    %97 = tpu.matmul %95, %96, %cst_37 {dimension_numbers = #tpu.dot_dimension_numbers<[1], [0], [0], [1], [0, 0, 1, 1], [], []>} : vector<8x32xf32>, vector<32x32xf32>, vector<8x32xf32> -> vector<8x32xf32>
    %98 = arith.addf %1, %97 : vector<8x32xf32>
    %99 = arith.mulf %98, %98 : vector<8x32xf32>
    %cst_38 = arith.constant dense<0.000000e+00> : vector<8xf32>
    %100 = vector.multi_reduction <add>, %99, %cst_38 [1] : vector<8x32xf32> to vector<8xf32>
    %101 = vector.shape_cast %100 : vector<8xf32> to vector<8x1xf32>
    %cst_39 = arith.constant 3.200000e+01 : f32
    %102 = vector.broadcast %cst_39 : f32 to vector<8x1xf32>
    %103 = arith.divf %101, %102 : vector<8x1xf32>
    %cst_40 = arith.constant 9.99999974E-6 : f32
    %104 = vector.broadcast %cst_40 : f32 to vector<8x1xf32>
    %105 = arith.addf %103, %104 : vector<8x1xf32>
    %106 = math.rsqrt %105 : vector<8x1xf32>
    %107 = vector.broadcast %106 : vector<8x1xf32> to vector<8x32xf32>
    %108 = arith.mulf %98, %107 : vector<8x32xf32>
    %c0_41 = arith.constant 0 : index
    %c0_42 = arith.constant 0 : index
    %109 = vector.load %arg3[%c0_41, %c0_42] : memref<1x32xf32, #tpu.memory_space<vmem>>, vector<1x32xf32>
    %110 = vector.broadcast %109 : vector<1x32xf32> to vector<8x32xf32>
    %111 = arith.mulf %108, %110 : vector<8x32xf32>
    %c0_43 = arith.constant 0 : index
    %c0_44 = arith.constant 0 : index
    %112 = vector.load %arg11[%c0_43, %c0_44] : memref<32x64xf32, #tpu.memory_space<vmem>>, vector<32x64xf32>
    %cst_45 = arith.constant dense<0.000000e+00> : vector<8x64xf32>
    %113 = tpu.matmul %111, %112, %cst_45 {dimension_numbers = #tpu.dot_dimension_numbers<[1], [0], [0], [1], [0, 0, 1, 1], [], []>} : vector<8x32xf32>, vector<32x64xf32>, vector<8x64xf32> -> vector<8x64xf32>
    %c0_46 = arith.constant 0 : index
    %c0_47 = arith.constant 0 : index
    %114 = vector.load %arg12[%c0_46, %c0_47] : memref<32x64xf32, #tpu.memory_space<vmem>>, vector<32x64xf32>
    %cst_48 = arith.constant dense<0.000000e+00> : vector<8x64xf32>
    %115 = tpu.matmul %111, %114, %cst_48 {dimension_numbers = #tpu.dot_dimension_numbers<[1], [0], [0], [1], [0, 0, 1, 1], [], []>} : vector<8x32xf32>, vector<32x64xf32>, vector<8x64xf32> -> vector<8x64xf32>
    %116 = arith.negf %113 : vector<8x64xf32>
    %117 = math.exp %116 : vector<8x64xf32>
    %cst_49 = arith.constant 1.000000e+00 : f32
    %118 = vector.broadcast %cst_49 : f32 to vector<8x64xf32>
    %119 = arith.addf %118, %117 : vector<8x64xf32>
    %120 = arith.divf %118, %119 : vector<8x64xf32>
    %121 = arith.mulf %113, %120 : vector<8x64xf32>
    %122 = arith.mulf %121, %115 : vector<8x64xf32>
    %c0_50 = arith.constant 0 : index
    %c0_51 = arith.constant 0 : index
    %123 = vector.load %arg13[%c0_50, %c0_51] : memref<64x32xf32, #tpu.memory_space<vmem>>, vector<64x32xf32>
    %cst_52 = arith.constant dense<0.000000e+00> : vector<8x32xf32>
    %124 = tpu.matmul %122, %123, %cst_52 {dimension_numbers = #tpu.dot_dimension_numbers<[1], [0], [0], [1], [0, 0, 1, 1], [], []>} : vector<8x64xf32>, vector<64x32xf32>, vector<8x32xf32> -> vector<8x32xf32>
    %125 = arith.addf %98, %124 : vector<8x32xf32>
    %126 = vector.extract_strided_slice %29 {offsets = [0, 32], sizes = [8, 32], strides = [1, 1]} : vector<8x64xf32> to vector<8x32xf32>
    %127 = tpu.concatenate %125, %126 in 1 : vector<8x32xf32>, vector<8x32xf32> -> vector<8x64xf32>
    %c0_53 = arith.constant 0 : index
    %c0_54 = arith.constant 0 : index
    %c0_55 = arith.constant 0 : index
    %128 = vector.load %arg14[%c0_53, %c0_54, %c0_55] : memref<1x8x64xf32, #tpu.memory_space<vmem>>, vector<1x8x64xf32>
    %129 = vector.shape_cast %128 : vector<1x8x64xf32> to vector<8x64xf32>
    %130 = vector.shape_cast %127 : vector<8x64xf32> to vector<1x8x64xf32>
    tpu.vector_store %arg14[%c0_53, %c0_54, %c0_55], %130 {strides = array<i32>} : memref<1x8x64xf32, #tpu.memory_space<vmem>>, vector<1x8x64xf32>,
    return
  }
  func.func @transform_0(%arg0: i32) -> (i32, i32, i32) {
    %c0_i32 = arith.constant 0 : i32
    %c0_i32_0 = arith.constant 0 : i32
    %c0_i32_1 = arith.constant 0 : i32
    return %arg0, %c0_i32, %c0_i32_0 : i32, i32, i32
  }
  func.func @transform_1(%arg0: i32) -> (i32, i32) {
    %c0_i32 = arith.constant 0 : i32
    %c0_i32_0 = arith.constant 0 : i32
    %c0_i32_1 = arith.constant 0 : i32
    return %c0_i32, %c0_i32_0 : i32, i32
  }
  func.func @transform_2(%arg0: i32) -> (i32, i32) {
    %c0_i32 = arith.constant 0 : i32
    %c0_i32_0 = arith.constant 0 : i32
    %c0_i32_1 = arith.constant 0 : i32
    return %c0_i32, %c0_i32_0 : i32, i32
  }
  func.func @transform_3(%arg0: i32) -> (i32, i32) {
    %c0_i32 = arith.constant 0 : i32
    %c0_i32_0 = arith.constant 0 : i32
    %c0_i32_1 = arith.constant 0 : i32
    return %c0_i32, %c0_i32_0 : i32, i32
  }
  func.func @transform_4(%arg0: i32) -> (i32, i32) {
    %c0_i32 = arith.constant 0 : i32
    %c0_i32_0 = arith.constant 0 : i32
    %c0_i32_1 = arith.constant 0 : i32
    return %c0_i32, %c0_i32_0 : i32, i32
  }
  func.func @transform_5(%arg0: i32) -> (i32, i32) {
    %c0_i32 = arith.constant 0 : i32
    %c0_i32_0 = arith.constant 0 : i32
    %c0_i32_1 = arith.constant 0 : i32
    return %c0_i32, %c0_i32_0 : i32, i32
  }
  func.func @transform_6(%arg0: i32) -> (i32, i32) {
    %c0_i32 = arith.constant 0 : i32
    %c0_i32_0 = arith.constant 0 : i32
    %c0_i32_1 = arith.constant 0 : i32
    return %c0_i32, %c0_i32_0 : i32, i32
  }
  func.func @transform_7(%arg0: i32) -> (i32, i32) {
    %c0_i32 = arith.constant 0 : i32
    %c0_i32_0 = arith.constant 0 : i32
    %c0_i32_1 = arith.constant 0 : i32
    return %c0_i32, %c0_i32_0 : i32, i32
  }
  func.func @transform_8(%arg0: i32) -> (i32, i32) {
    %c0_i32 = arith.constant 0 : i32
    %c0_i32_0 = arith.constant 0 : i32
    %c0_i32_1 = arith.constant 0 : i32
    return %c0_i32, %c0_i32_0 : i32, i32
  }
  func.func @transform_9(%arg0: i32) -> (i32, i32) {
    %c0_i32 = arith.constant 0 : i32
    %c0_i32_0 = arith.constant 0 : i32
    %c0_i32_1 = arith.constant 0 : i32
    return %c0_i32, %c0_i32_0 : i32, i32
  }
  func.func @transform_10(%arg0: i32) -> (i32, i32) {
    %c0_i32 = arith.constant 0 : i32
    %c0_i32_0 = arith.constant 0 : i32
    %c0_i32_1 = arith.constant 0 : i32
    return %c0_i32, %c0_i32_0 : i32, i32
  }
  func.func @transform_11(%arg0: i32) -> (i32, i32) {
    %c0_i32 = arith.constant 0 : i32
    %c0_i32_0 = arith.constant 0 : i32
    %c0_i32_1 = arith.constant 0 : i32
    return %c0_i32, %c0_i32_0 : i32, i32
  }
  func.func @transform_12(%arg0: i32) -> (i32, i32) {
    %c0_i32 = arith.constant 0 : i32
    %c0_i32_0 = arith.constant 0 : i32
    %c0_i32_1 = arith.constant 0 : i32
    return %c0_i32, %c0_i32_0 : i32, i32
  }
  func.func @transform_13(%arg0: i32) -> (i32, i32, i32) {
    %c0_i32 = arith.constant 0 : i32
    %c0_i32_0 = arith.constant 0 : i32
    %c0_i32_1 = arith.constant 0 : i32
    return %arg0, %c0_i32, %c0_i32_0 : i32, i32, i32
  }
}

</mosaic_0001>

<llo_original>
// kernel: tpu_custom_call.1
$region0: #{tpu_custom_call.1}
  #allocation0 [shape = 'u32[]', space=smem, size = 0x4, offset = 0x4, fixed_abs, tag = 'smem constant byte address 0x4 - core index']
  #allocation1 [shape = 'u32[144,128]{1,0:T(1,128)}', space=vmem, size = 0x12000, scoped, tag = 'internal scratch']
  %s0 = inlined_call_operand.hbm [shape: f32[2,8,32], index: 0, kind: input, shape index: {}]
  %s1 = inlined_call_operand.vmem [shape: f32[1,32], index: 1, kind: input, shape index: {}]
  %s2 = inlined_call_operand.vmem [shape: f32[1,32], index: 2, kind: input, shape index: {}]
  %s3 = inlined_call_operand.vmem [shape: f32[32,64], index: 3, kind: input, shape index: {}]
  %s4 = inlined_call_operand.vmem [shape: f32[1,64], index: 4, kind: input, shape index: {}]
  %s5 = inlined_call_operand.vmem [shape: f32[8,64], index: 5, kind: input, shape index: {}]
  %s6 = inlined_call_operand.hbm [shape: f32[8,64], index: 6, kind: input, shape index: {}]
  %s7 = inlined_call_operand.hbm [shape: f32[8,64], index: 7, kind: input, shape index: {}]
  %s8 = inlined_call_operand.hbm [shape: f32[8,8], index: 8, kind: input, shape index: {}]
  %s9 = inlined_call_operand.vmem [shape: f32[32,32], index: 9, kind: input, shape index: {}]
  %s10 = inlined_call_operand.vmem [shape: f32[32,64], index: 10, kind: input, shape index: {}]
  %s11 = inlined_call_operand.hbm [shape: f32[32,64], index: 11, kind: input, shape index: {}]
  %s12 = inlined_call_operand.vmem [shape: f32[64,32], index: 12, kind: input, shape index: {}]
  %s13 = inlined_call_operand.hbm [shape: f32[2,8,64], index: 13, kind: output, shape index: {}]
  %s14 = sld [smem:[#allocation0]]
  $region105: #{tpu_custom_call.1} parent=0
    _
  %s16 = ssub.s32 1, %s14
  %s17 = scalar_select 0, %s16, %s14
  $region1: #{tpu_custom_call.1} parent=0
    #allocation2 [shape = 'u8[8192]{0}', space=vmem, size = 0x2000, scoped, tag = 'input window, operand 0']
    #allocation3 [shape = 's32[2]{0}', space=sflag, size = 0x8, scoped, tag = 'scoped memory for tpu_custom_call.1']
    #allocation4 [shape = 's32[2]{0}', space=sflag, size = 0x8, scoped, tag = 'scoped memory for tpu_custom_call.1']
    #allocation5 [shape = 'u8[4096]{0}', space=vmem, size = 0x1000, scoped, tag = 'input window, operand 6, single buffered']
    #allocation6 [shape = 's32[1]{0}', space=sflag, size = 0x4, scoped, tag = 'scoped memory for tpu_custom_call.1']
    #allocation7 [shape = 'u8[4096]{0}', space=vmem, size = 0x1000, scoped, tag = 'input window, operand 7, single buffered']
    #allocation8 [shape = 'u8[4096]{0}', space=vmem, size = 0x1000, scoped, tag = 'input window, operand 8, single buffered']
    #allocation9 [shape = 's32[1]{0}', space=sflag, size = 0x4, scoped, tag = 'scoped memory for tpu_custom_call.1']
    #allocation10 [shape = 'u8[16384]{0}', space=vmem, size = 0x4000, scoped, tag = 'input window, operand 11, single buffered']
    #allocation11 [shape = 'u8[8192]{0}', space=vmem, size = 0x2000, scoped, tag = 'output window, operand 0']
    %18 = vsyncpa [#allocation3], 0
    %s19 = scalar_lea.sflag [#allocation3], 1
    %20 = vsyncpa %s19, 0
    %21 = vsyncpa [#allocation6], 0
    %22 = vsyncpa [#allocation9], 0
    %23 = vsyncpa [#allocation4], 0
    %s24 = scalar_lea.sflag [#allocation4], 1
    %25 = vsyncpa %s24, 0
    loop: start=0, step=1, limit=4
    $region2: #{tpu_custom_call.1} parent=1 // loop_pre_header
      _
    $region3: #{tpu_custom_call.1} parent=1 // loop_header
      %s27 = sphi 0, %s31
      %p28 = scmp.ge.s32.totalorder %s27, 4
      %s37 = sphi 0, %s39
      %s40 = sphi 0, %s37
      %s41 = sphi 0, %s40
      %s57 = sphi 0, %s41
      %s61 = sphi 0, %s61
      %s63 = sphi 0, %s61
      %s64 = sphi 0, %s63
      %s78 = sphi 0, %s64
      %s82 = sphi 0, %s82
      %s84 = sphi 0, %s82
      %s85 = sphi 0, %s84
      %s99 = sphi 0, %s85
      %s103 = sphi 0, %s103
      %s105 = sphi 0, %s103
      %s106 = sphi 0, %s105
      %s120 = sphi 0, %s106
      %s124 = sphi 0, %s124
      %s126 = sphi 0, %s124
      %s127 = sphi 0, %s126
      %s141 = sphi 0, %s127
      %s145 = sphi 0, %s145
      %s147 = sphi 0, %s145
      %s148 = sphi 0, %s147
      %s162 = sphi 0, %s148
      %s166 = sphi 0, %s166
      %s168 = sphi 0, %s166
      %s169 = sphi 0, %s168
      %s183 = sphi 0, %s169
      %s187 = sphi 0, %s187
      %s189 = sphi 0, %s187
      %s190 = sphi 0, %s189
      %s204 = sphi 0, %s190
      %s208 = sphi 0, %s208
      %s210 = sphi 0, %s208
      %s211 = sphi 0, %s210
      %s225 = sphi 0, %s211
      %s229 = sphi 0, %s229
      %s231 = sphi 0, %s229
      %s232 = sphi 0, %s231
      %s246 = sphi 0, %s232
      %s250 = sphi 0, %s250
      %s252 = sphi 0, %s250
      %s253 = sphi 0, %s252
      %s267 = sphi 0, %s253
      %s271 = sphi 0, %s271
      %s273 = sphi 0, %s271
      %s274 = sphi 0, %s273
      %s288 = sphi 0, %s274
      %s292 = sphi 0, %s292
      %s294 = sphi 0, %s292
      %s295 = sphi 0, %s294
      %s309 = sphi 0, %s295
      %s315 = sphi 0, %s317
      %s318 = sphi 0, %s315
      %s319 = sphi 0, %s318
      %s335 = sphi 0, %s319
    $region4: #{tpu_custom_call.1} parent=1 // loop_header_branch
      %30 = sbr.rel (%p28) target = $region8
    $region5: #{tpu_custom_call.1} parent=1 // loop_body
      %s32 = ssub.s32 %s27, 1
      %s33 = ssub.s32 %s27, 2
      %s34 = sadd.s32 %s27, 1
      %s35 = ssub.s32 %s27, %s34
      %p36 = scmp.eq.s32.totalorder %s35, 0
      %s38 = sadd.s32 %s37, 1
      %s39 = scalar_select %p36, %s37, %s38
      %p42 = pneg %p36
      %p43 = scmp.eq.s32.totalorder %s27, 1
      %p44 = por %p42, %p43
      %p45 = scmp.ne.s32.totalorder %s37, %s40
      %p46 = scmp.eq.s32.totalorder %s27, 0
      %p47 = por %p45, %p46
      %p48 = scmp.ne.s32.totalorder %s37, %s40
      %p49 = scmp.eq.s32.totalorder %s32, 1
      %p50 = por %p48, %p49
      %p51 = scmp.ne.s32.totalorder %s40, %s41
      %p52 = scmp.eq.s32.totalorder %s32, 0
      %p53 = por %p51, %p52
      %p54 = scmp.ne.s32.totalorder %s40, %s41
      %p55 = scmp.eq.s32.totalorder %s33, 1
      %p56 = por %p54, %p55
      %p58 = scmp.ne.s32.totalorder %s41, %s57
      %p59 = scmp.eq.s32.totalorder %s33, 0
      %p60 = por %p58, %p59
      %s62 = sadd.s32 %s61, 1
      %p65 = scmp.eq.s32.totalorder %s27, 1
      %p66 = scmp.ne.s32.totalorder %s61, %s63
      %p67 = scmp.eq.s32.totalorder %s27, 0
      %p68 = por %p66, %p67
      %p69 = scmp.ne.s32.totalorder %s61, %s63
      %p70 = scmp.eq.s32.totalorder %s32, 1
      %p71 = por %p69, %p70
      %p72 = scmp.ne.s32.totalorder %s63, %s64
      %p73 = scmp.eq.s32.totalorder %s32, 0
      %p74 = por %p72, %p73
      %p75 = scmp.ne.s32.totalorder %s63, %s64
      %p76 = scmp.eq.s32.totalorder %s33, 1
      %p77 = por %p75, %p76
      %p79 = scmp.ne.s32.totalorder %s64, %s78
      %p80 = scmp.eq.s32.totalorder %s33, 0
      %p81 = por %p79, %p80
      %s83 = sadd.s32 %s82, 1
      %p86 = scmp.eq.s32.totalorder %s27, 1
      %p87 = scmp.ne.s32.totalorder %s82, %s84
      %p88 = scmp.eq.s32.totalorder %s27, 0
      %p89 = por %p87, %p88
      %p90 = scmp.ne.s32.totalorder %s82, %s84
      %p91 = scmp.eq.s32.totalorder %s32, 1
      %p92 = por %p90, %p91
      %p93 = scmp.ne.s32.totalorder %s84, %s85
      %p94 = scmp.eq.s32.totalorder %s32, 0
      %p95 = por %p93, %p94
      %p96 = scmp.ne.s32.totalorder %s84, %s85
      %p97 = scmp.eq.s32.totalorder %s33, 1
      %p98 = por %p96, %p97
      %p100 = scmp.ne.s32.totalorder %s85, %s99
      %p101 = scmp.eq.s32.totalorder %s33, 0
      %p102 = por %p100, %p101
      %s104 = sadd.s32 %s103, 1
      %p107 = scmp.eq.s32.totalorder %s27, 1
      %p108 = scmp.ne.s32.totalorder %s103, %s105
      %p109 = scmp.eq.s32.totalorder %s27, 0
      %p110 = por %p108, %p109
      %p111 = scmp.ne.s32.totalorder %s103, %s105
      %p112 = scmp.eq.s32.totalorder %s32, 1
      %p113 = por %p111, %p112
      %p114 = scmp.ne.s32.totalorder %s105, %s106
      %p115 = scmp.eq.s32.totalorder %s32, 0
      %p116 = por %p114, %p115
      %p117 = scmp.ne.s32.totalorder %s105, %s106
      %p118 = scmp.eq.s32.totalorder %s33, 1
      %p119 = por %p117, %p118
      %p121 = scmp.ne.s32.totalorder %s106, %s120
      %p122 = scmp.eq.s32.totalorder %s33, 0
      %p123 = por %p121, %p122
      %s125 = sadd.s32 %s124, 1
      %p128 = scmp.eq.s32.totalorder %s27, 1
      %p129 = scmp.ne.s32.totalorder %s124, %s126
      %p130 = scmp.eq.s32.totalorder %s27, 0
      %p131 = por %p129, %p130
      %p132 = scmp.ne.s32.totalorder %s124, %s126
      %p133 = scmp.eq.s32.totalorder %s32, 1
      %p134 = por %p132, %p133
      %p135 = scmp.ne.s32.totalorder %s126, %s127
      %p136 = scmp.eq.s32.totalorder %s32, 0
      %p137 = por %p135, %p136
      %p138 = scmp.ne.s32.totalorder %s126, %s127
      %p139 = scmp.eq.s32.totalorder %s33, 1
      %p140 = por %p138, %p139
      %p142 = scmp.ne.s32.totalorder %s127, %s141
      %p143 = scmp.eq.s32.totalorder %s33, 0
      %p144 = por %p142, %p143
      %s146 = sadd.s32 %s145, 1
      %p149 = scmp.eq.s32.totalorder %s27, 1
      %p150 = scmp.ne.s32.totalorder %s145, %s147
      %p151 = scmp.eq.s32.totalorder %s27, 0
      %p152 = por %p150, %p151
      %p153 = scmp.ne.s32.totalorder %s145, %s147
      %p154 = scmp.eq.s32.totalorder %s32, 1
      %p155 = por %p153, %p154
      %p156 = scmp.ne.s32.totalorder %s147, %s148
      %p157 = scmp.eq.s32.totalorder %s32, 0
      %p158 = por %p156, %p157
      %p159 = scmp.ne.s32.totalorder %s147, %s148
      %p160 = scmp.eq.s32.totalorder %s33, 1
      %p161 = por %p159, %p160
      %p163 = scmp.ne.s32.totalorder %s148, %s162
      %p164 = scmp.eq.s32.totalorder %s33, 0
      %p165 = por %p163, %p164
      %s167 = sadd.s32 %s166, 1
      %p170 = scmp.eq.s32.totalorder %s27, 1
      %p171 = scmp.ne.s32.totalorder %s166, %s168
      %p172 = scmp.eq.s32.totalorder %s27, 0
      %p173 = por %p171, %p172
      %p174 = scmp.ne.s32.totalorder %s166, %s168
      %p175 = scmp.eq.s32.totalorder %s32, 1
      %p176 = por %p174, %p175
      %p177 = scmp.ne.s32.totalorder %s168, %s169
      %p178 = scmp.eq.s32.totalorder %s32, 0
      %p179 = por %p177, %p178
      %p180 = scmp.ne.s32.totalorder %s168, %s169
      %p181 = scmp.eq.s32.totalorder %s33, 1
      %p182 = por %p180, %p181
      %p184 = scmp.ne.s32.totalorder %s169, %s183
      %p185 = scmp.eq.s32.totalorder %s33, 0
      %p186 = por %p184, %p185
      %s188 = sadd.s32 %s187, 1
      %p191 = scmp.eq.s32.totalorder %s27, 1
      %p192 = scmp.ne.s32.totalorder %s187, %s189
      %p193 = scmp.eq.s32.totalorder %s27, 0
      %p194 = por %p192, %p193
      %p195 = scmp.ne.s32.totalorder %s187, %s189
      %p196 = scmp.eq.s32.totalorder %s32, 1
      %p197 = por %p195, %p196
      %p198 = scmp.ne.s32.totalorder %s189, %s190
      %p199 = scmp.eq.s32.totalorder %s32, 0
      %p200 = por %p198, %p199
      %p201 = scmp.ne.s32.totalorder %s189, %s190
      %p202 = scmp.eq.s32.totalorder %s33, 1
      %p203 = por %p201, %p202
      %p205 = scmp.ne.s32.totalorder %s190, %s204
      %p206 = scmp.eq.s32.totalorder %s33, 0
      %p207 = por %p205, %p206
      %s209 = sadd.s32 %s208, 1
      %p212 = scmp.eq.s32.totalorder %s27, 1
      %p213 = scmp.ne.s32.totalorder %s208, %s210
      %p214 = scmp.eq.s32.totalorder %s27, 0
      %p215 = por %p213, %p214
      %p216 = scmp.ne.s32.totalorder %s208, %s210
      %p217 = scmp.eq.s32.totalorder %s32, 1
      %p218 = por %p216, %p217
      %p219 = scmp.ne.s32.totalorder %s210, %s211
      %p220 = scmp.eq.s32.totalorder %s32, 0
      %p221 = por %p219, %p220
      %p222 = scmp.ne.s32.totalorder %s210, %s211
      %p223 = scmp.eq.s32.totalorder %s33, 1
      %p224 = por %p222, %p223
      %p226 = scmp.ne.s32.totalorder %s211, %s225
      %p227 = scmp.eq.s32.totalorder %s33, 0
      %p228 = por %p226, %p227
      %s230 = sadd.s32 %s229, 1
      %p233 = scmp.eq.s32.totalorder %s27, 1
      %p234 = scmp.ne.s32.totalorder %s229, %s231
      %p235 = scmp.eq.s32.totalorder %s27, 0
      %p236 = por %p234, %p235
      %p237 = scmp.ne.s32.totalorder %s229, %s231
      %p238 = scmp.eq.s32.totalorder %s32, 1
      %p239 = por %p237, %p238
      %p240 = scmp.ne.s32.totalorder %s231, %s232
      %p241 = scmp.eq.s32.totalorder %s32, 0
      %p242 = por %p240, %p241
      %p243 = scmp.ne.s32.totalorder %s231, %s232
      %p244 = scmp.eq.s32.totalorder %s33, 1
      %p245 = por %p243, %p244
      %p247 = scmp.ne.s32.totalorder %s232, %s246
      %p248 = scmp.eq.s32.totalorder %s33, 0
      %p249 = por %p247, %p248
      %s251 = sadd.s32 %s250, 1
      %p254 = scmp.eq.s32.totalorder %s27, 1
      %p255 = scmp.ne.s32.totalorder %s250, %s252
      %p256 = scmp.eq.s32.totalorder %s27, 0
      %p257 = por %p255, %p256
      %p258 = scmp.ne.s32.totalorder %s250, %s252
      %p259 = scmp.eq.s32.totalorder %s32, 1
      %p260 = por %p258, %p259
      %p261 = scmp.ne.s32.totalorder %s252, %s253
      %p262 = scmp.eq.s32.totalorder %s32, 0
      %p263 = por %p261, %p262
      %p264 = scmp.ne.s32.totalorder %s252, %s253
      %p265 = scmp.eq.s32.totalorder %s33, 1
      %p266 = por %p264, %p265
      %p268 = scmp.ne.s32.totalorder %s253, %s267
      %p269 = scmp.eq.s32.totalorder %s33, 0
      %p270 = por %p268, %p269
      %s272 = sadd.s32 %s271, 1
      %p275 = scmp.eq.s32.totalorder %s27, 1
      %p276 = scmp.ne.s32.totalorder %s271, %s273
      %p277 = scmp.eq.s32.totalorder %s27, 0
      %p278 = por %p276, %p277
      %p279 = scmp.ne.s32.totalorder %s271, %s273
      %p280 = scmp.eq.s32.totalorder %s32, 1
      %p281 = por %p279, %p280
      %p282 = scmp.ne.s32.totalorder %s273, %s274
      %p283 = scmp.eq.s32.totalorder %s32, 0
      %p284 = por %p282, %p283
      %p285 = scmp.ne.s32.totalorder %s273, %s274
      %p286 = scmp.eq.s32.totalorder %s33, 1
      %p287 = por %p285, %p286
      %p289 = scmp.ne.s32.totalorder %s274, %s288
      %p290 = scmp.eq.s32.totalorder %s33, 0
      %p291 = por %p289, %p290
      %s293 = sadd.s32 %s292, 1
      %p296 = scmp.eq.s32.totalorder %s27, 1
      %p297 = scmp.ne.s32.totalorder %s292, %s294
      %p298 = scmp.eq.s32.totalorder %s27, 0
      %p299 = por %p297, %p298
      %p300 = scmp.ne.s32.totalorder %s292, %s294
      %p301 = scmp.eq.s32.totalorder %s32, 1
      %p302 = por %p300, %p301
      %p303 = scmp.ne.s32.totalorder %s294, %s295
      %p304 = scmp.eq.s32.totalorder %s32, 0
      %p305 = por %p303, %p304
      %p306 = scmp.ne.s32.totalorder %s294, %s295
      %p307 = scmp.eq.s32.totalorder %s33, 1
      %p308 = por %p306, %p307
      %p310 = scmp.ne.s32.totalorder %s295, %s309
      %p311 = scmp.eq.s32.totalorder %s33, 0
      %p312 = por %p310, %p311
      %s313 = ssub.s32 %s27, %s34
      %p314 = scmp.eq.s32.totalorder %s313, 0
      %s316 = sadd.s32 %s315, 1
      %s317 = scalar_select %p314, %s315, %s316
      %p320 = pneg %p314
      %p321 = scmp.eq.s32.totalorder %s27, 1
      %p322 = por %p320, %p321
      %p323 = scmp.ne.s32.totalorder %s315, %s318
      %p324 = scmp.eq.s32.totalorder %s27, 0
      %p325 = por %p323, %p324
      %p326 = scmp.ne.s32.totalorder %s315, %s318
      %p327 = scmp.eq.s32.totalorder %s32, 1
      %p328 = por %p326, %p327
      %p329 = scmp.ne.s32.totalorder %s318, %s319
      %p330 = scmp.eq.s32.totalorder %s32, 0
      %p331 = por %p329, %p330
      %p332 = scmp.ne.s32.totalorder %s318, %s319
      %p333 = scmp.eq.s32.totalorder %s33, 1
      %p334 = por %p332, %p333
      %p336 = scmp.ne.s32.totalorder %s319, %s335
      %p337 = scmp.eq.s32.totalorder %s33, 0
      %p338 = por %p336, %p337
      %p339 = scmp.le.s32.totalorder 1, %s27
      %p340 = scmp.lt.s32.totalorder %s27, 3
      %p341 = pnand %p339, %p340
      %p342 = pneg %p341
      // Predicated region
      $region9: #{tpu_custom_call.1} parent=5 // pred_check
        _
      $region10: #{tpu_custom_call.1} parent=5 // pred_check_branch
        %344 = sbr.rel (%p341) target = $region12
      $region11: #{tpu_custom_call.1} parent=5 // pred_region
        %s345 = ssub.s32 %s27, 1
        // Predicated region
        $region13: #{tpu_custom_call.1} parent=11 // pred_check
          %p346 = pneg %p74
        $region14: #{tpu_custom_call.1} parent=11 // pred_check_branch
          %348 = sbr.rel (%p346) target = $region16
        $region15: #{tpu_custom_call.1} parent=11 // pred_region
          _
        $region16: #{tpu_custom_call.1} parent=11 // pred_fallthru
          _
        // Predicated region
        $region17: #{tpu_custom_call.1} parent=11 // pred_check
          %p349 = pneg %p95
        $region18: #{tpu_custom_call.1} parent=11 // pred_check_branch
          %351 = sbr.rel (%p349) target = $region20
        $region19: #{tpu_custom_call.1} parent=11 // pred_region
          _
        $region20: #{tpu_custom_call.1} parent=11 // pred_fallthru
          _
        // Predicated region
        $region21: #{tpu_custom_call.1} parent=11 // pred_check
          %p352 = pneg %p116
        $region22: #{tpu_custom_call.1} parent=11 // pred_check_branch
          %354 = sbr.rel (%p352) target = $region24
        $region23: #{tpu_custom_call.1} parent=11 // pred_region
          _
        $region24: #{tpu_custom_call.1} parent=11 // pred_fallthru
          _
        // Predicated region
        $region25: #{tpu_custom_call.1} parent=11 // pred_check
          %p355 = pneg %p137
        $region26: #{tpu_custom_call.1} parent=11 // pred_check_branch
          %357 = sbr.rel (%p355) target = $region28
        $region27: #{tpu_custom_call.1} parent=11 // pred_region
          _
        $region28: #{tpu_custom_call.1} parent=11 // pred_fallthru
          _
        // Predicated region
        $region29: #{tpu_custom_call.1} parent=11 // pred_check
          %p358 = pneg %p158
        $region30: #{tpu_custom_call.1} parent=11 // pred_check_branch
          %360 = sbr.rel (%p358) target = $region32
        $region31: #{tpu_custom_call.1} parent=11 // pred_region
          _
        $region32: #{tpu_custom_call.1} parent=11 // pred_fallthru
          _
        // Predicated region
        $region33: #{tpu_custom_call.1} parent=11 // pred_check
          %p361 = pneg %p179
        $region34: #{tpu_custom_call.1} parent=11 // pred_check_branch
          %363 = sbr.rel (%p361) target = $region36
        $region35: #{tpu_custom_call.1} parent=11 // pred_region
          %s365 = ssub.s32 128, 128
          %366 = vsyncadd [#allocation6], %s365
          %s368 = sshll.u32 [#allocation5], 4
          %s369 = int_to_ptr.vmem [resolvable:$true] %s368
          %371 = dma.hbm_to_vmem [thread:$0]  %s6, 128, %s369, [#allocation6]
        $region36: #{tpu_custom_call.1} parent=11 // pred_fallthru
          _
        // Predicated region
        $region37: #{tpu_custom_call.1} parent=11 // pred_check
          %p372 = pneg %p200
        $region38: #{tpu_custom_call.1} parent=11 // pred_check_branch
          %374 = sbr.rel (%p372) target = $region40
        $region39: #{tpu_custom_call.1} parent=11 // pred_region
          %s376 = ssub.s32 128, 128
          %377 = vsyncadd [#allocation6], %s376
          %s379 = sshll.u32 [#allocation7], 4
          %s380 = int_to_ptr.vmem [resolvable:$true] %s379
          %382 = dma.hbm_to_vmem [thread:$0]  %s7, 128, %s380, [#allocation6]
        $region40: #{tpu_custom_call.1} parent=11 // pred_fallthru
          _
        // Predicated region
        $region41: #{tpu_custom_call.1} parent=11 // pred_check
          %p383 = pneg %p221
        $region42: #{tpu_custom_call.1} parent=11 // pred_check_branch
          %385 = sbr.rel (%p383) target = $region44
        $region43: #{tpu_custom_call.1} parent=11 // pred_region
          %s387 = ssub.s32 128, 128
          %388 = vsyncadd [#allocation9], %s387
          %s390 = sshll.u32 [#allocation8], 4
          %s391 = int_to_ptr.vmem [resolvable:$true] %s390
          %393 = dma.hbm_to_vmem [thread:$0]  %s8, 128, %s391, [#allocation9]
        $region44: #{tpu_custom_call.1} parent=11 // pred_fallthru
          _
        // Predicated region
        $region45: #{tpu_custom_call.1} parent=11 // pred_check
          %p394 = pneg %p242
        $region46: #{tpu_custom_call.1} parent=11 // pred_check_branch
          %396 = sbr.rel (%p394) target = $region48
        $region47: #{tpu_custom_call.1} parent=11 // pred_region
          _
        $region48: #{tpu_custom_call.1} parent=11 // pred_fallthru
          _
        // Predicated region
        $region49: #{tpu_custom_call.1} parent=11 // pred_check
          %p397 = pneg %p263
        $region50: #{tpu_custom_call.1} parent=11 // pred_check_branch
          %399 = sbr.rel (%p397) target = $region52
        $region51: #{tpu_custom_call.1} parent=11 // pred_region
          _
        $region52: #{tpu_custom_call.1} parent=11 // pred_fallthru
          _
        // Predicated region
        $region53: #{tpu_custom_call.1} parent=11 // pred_check
          %p400 = pneg %p284
        $region54: #{tpu_custom_call.1} parent=11 // pred_check_branch
          %402 = sbr.rel (%p400) target = $region56
        $region55: #{tpu_custom_call.1} parent=11 // pred_region
          %s404 = ssub.s32 512, 512
          %405 = vsyncadd [#allocation9], %s404
          %s406 = sshll.u32 [#allocation10], 4
          %s407 = int_to_ptr.vmem [resolvable:$true] %s406
          %412 = dma.hbm_to_vmem [thread:$0]  %s11, 512, %s407, [#allocation9], 128, 128, 8
        $region56: #{tpu_custom_call.1} parent=11 // pred_fallthru
          _
        // Predicated region
        $region57: #{tpu_custom_call.1} parent=11 // pred_check
          %p413 = pneg %p305
        $region58: #{tpu_custom_call.1} parent=11 // pred_check_branch
          %415 = sbr.rel (%p413) target = $region60
        $region59: #{tpu_custom_call.1} parent=11 // pred_region
          _
        $region60: #{tpu_custom_call.1} parent=11 // pred_fallthru
          _
      $region12: #{tpu_custom_call.1} parent=5 // pred_fallthru
        _
      %p416 = scmp.lt.s32.totalorder %s27, 2
      // Predicated region
      $region61: #{tpu_custom_call.1} parent=5 // pred_check
        %p417 = pneg %p416
      $region62: #{tpu_custom_call.1} parent=5 // pred_check_branch
        %419 = sbr.rel (%p417) target = $region64
      $region63: #{tpu_custom_call.1} parent=5 // pred_region
        // Predicated region
        $region65: #{tpu_custom_call.1} parent=63 // pred_check
          %p420 = pneg %p47
        $region66: #{tpu_custom_call.1} parent=63 // pred_check_branch
          %422 = sbr.rel (%p420) target = $region68
        $region67: #{tpu_custom_call.1} parent=63 // pred_region
          %s423 = sand.u32 %s37, 1
          %s424 = scalar_lea.sflag [#allocation3], %s423
          %s425 = sand.u32 %s37, 1
          %s426 = smul.addr %s425, 8
          %s427 = scalar_lea.vmem [#allocation2], %s426
          %s429 = ssub.s32 128, 128
          %430 = vsyncadd %s424, %s429
          %s431 = smul.addr %s27, 128
          %s432 = scalar_lea.hbm %s0, %s431
          %s434 = sshll.u32 %s427, 4
          %s435 = int_to_ptr.vmem [resolvable:$true] %s434
          %437 = dma.hbm_to_vmem [thread:$0]  %s432, 128, %s435, %s424
        $region68: #{tpu_custom_call.1} parent=63 // pred_fallthru
          _
      $region64: #{tpu_custom_call.1} parent=5 // pred_fallthru
        _
      %p438 = scmp.le.s32.totalorder 1, %s27
      %p439 = scmp.lt.s32.totalorder %s27, 3
      %p440 = pnand %p438, %p439
      %p441 = pneg %p440
      // Predicated region
      $region69: #{tpu_custom_call.1} parent=5 // pred_check
        _
      $region70: #{tpu_custom_call.1} parent=5 // pred_check_branch
        %443 = sbr.rel (%p440) target = $region72
      $region71: #{tpu_custom_call.1} parent=5 // pred_region
        %s444 = ssub.s32 %s27, 1
        %s445 = sand.u32 %s40, 1
        %s446 = scalar_lea.sflag [#allocation3], %s445
        %s447 = sand.u32 %s40, 1
        %s448 = smul.addr %s447, 8
        %s449 = scalar_lea.vmem [#allocation2], %s448
        // Predicated region
        $region73: #{tpu_custom_call.1} parent=71 // pred_check
          %p450 = pneg %p53
        $region74: #{tpu_custom_call.1} parent=71 // pred_check_branch
          %452 = sbr.rel (%p450) target = $region76
        $region75: #{tpu_custom_call.1} parent=71 // pred_region
          %453 = dma.done %s446, 128
        $region76: #{tpu_custom_call.1} parent=71 // pred_fallthru
          _
        // Predicated region
        $region77: #{tpu_custom_call.1} parent=71 // pred_check
          %p454 = pneg %p179
        $region78: #{tpu_custom_call.1} parent=71 // pred_check_branch
          %456 = sbr.rel (%p454) target = $region80
        $region79: #{tpu_custom_call.1} parent=71 // pred_region
          %457 = dma.done [#allocation6], 128
        $region80: #{tpu_custom_call.1} parent=71 // pred_fallthru
          _
        // Predicated region
        $region81: #{tpu_custom_call.1} parent=71 // pred_check
          %p458 = pneg %p200
        $region82: #{tpu_custom_call.1} parent=71 // pred_check_branch
          %460 = sbr.rel (%p458) target = $region84
        $region83: #{tpu_custom_call.1} parent=71 // pred_region
          %461 = dma.done [#allocation6], 128
        $region84: #{tpu_custom_call.1} parent=71 // pred_fallthru
          _
        // Predicated region
        $region85: #{tpu_custom_call.1} parent=71 // pred_check
          %p462 = pneg %p221
        $region86: #{tpu_custom_call.1} parent=71 // pred_check_branch
          %464 = sbr.rel (%p462) target = $region88
        $region87: #{tpu_custom_call.1} parent=71 // pred_region
          %465 = dma.done [#allocation9], 128
        $region88: #{tpu_custom_call.1} parent=71 // pred_fallthru
          _
        // Predicated region
        $region89: #{tpu_custom_call.1} parent=71 // pred_check
          %p466 = pneg %p284
        $region90: #{tpu_custom_call.1} parent=71 // pred_check_branch
          %468 = sbr.rel (%p466) target = $region92
        $region91: #{tpu_custom_call.1} parent=71 // pred_region
          %469 = dma.done [#allocation9], 512
        $region92: #{tpu_custom_call.1} parent=71 // pred_fallthru
          _
        %s470 = sand.u32 %s40, 1
        %s471 = scalar_lea.sflag [#allocation3], %s470
        %s472 = sand.u32 %s40, 1
        %s473 = smul.addr %s472, 8
        %s474 = scalar_lea.vmem [#allocation2], %s473
        %p475 = pneg %p53
        %p476 = pneg %p50
        %p477 = pneg %p74
        %p478 = pneg %p71
        %p479 = pneg %p95
        %p480 = pneg %p92
        %p481 = pneg %p116
        %p482 = pneg %p113
        %p483 = pneg %p137
        %p484 = pneg %p134
        %p485 = pneg %p158
        %p486 = pneg %p155
        %p487 = pneg %p179
        %p488 = pneg %p176
        %p489 = pneg %p200
        %p490 = pneg %p197
        %p491 = pneg %p221
        %p492 = pneg %p218
        %p493 = pneg %p242
        %p494 = pneg %p239
        %p495 = pneg %p263
        %p496 = pneg %p260
        %p497 = pneg %p284
        %p498 = pneg %p281
        %p499 = pneg %p305
        %p500 = pneg %p302
        %p501 = pneg %p331
        %p502 = pneg %p328
        %s503 = sand.u32 %s318, 1
        %s504 = scalar_lea.sflag [#allocation4], %s503
        %s505 = sand.u32 %s318, 1
        %s506 = smul.addr %s505, 8
        %s507 = scalar_lea.vmem [#allocation11], %s506
        %v508 = vld [vmem:[%s449] sm:$0xff]
        %v509 = vmul.f32 %v508, %v508
        %vm510 = vcmask 261120
        %v511 = vsel %vm510, %v509, 0.0
        %512 = vadd.xlane.f32.xlu0 %v511
        %v513 = vpop.xlane.xlu0 %512
        %v514 = vrcp.pop 32.0
        %v515 = vmul.f32 %v513, %v514
        %v516 = vadd.f32 %v515, 1e-05
        %v517 = vrsqrt.pop %v516
        %v518 = vmul.f32 %v508, %v517
        %v519 = vld [vmem:[%s1] sm:$0x1]
        %v521 = vlaneseq
        %v522 = vshrl.u32 %v521, 7
        %v523 = vsub.s32 0, %v522
        %v524 = vrot.slane %v519, %v523
        %v526 = vmul.f32 %v518, %v524
        %v527 = vld [vmem:[%s3] sm:$0xff]
        %v528 = vld [vmem:[%s3 + $0x8] sm:$0xff]
        %v529 = vld [vmem:[%s3 + $0x10] sm:$0xff]
        %v530 = vld [vmem:[%s3 + $0x18] sm:$0xff]
        %v531 = vld [vmem:[%s4] sm:$0x1]
        %v533 = vlaneseq
        %v534 = vshrl.u32 %v533, 7
        %v535 = vsub.s32 0, %v534
        %v536 = vrot.slane %v531, %v535
        %v539 = vsel %vm510, %v526, 0
        %541 = vmatprep.subr.mxu0 0.0
        %542 = vmatpush1.msra.mxu0 %v527
        %543 = vmatprep.subr.mxu0 0.0
        %544 = vmatpush1.msra.mxu0 %v528
        %545 = vmatprep.subr.mxu0 0.0
        %546 = vmatpush1.msra.mxu0 %v529
        %547 = vmatprep.subr.mxu0 0.0
        %548 = vmatpush1.msra.mxu0 %v530
        %549 = vmatprep.subr.mxu0 0.0
        %550 = vmatpush1.msra.mxu0 0.0
        %551 = vmatprep.subr.mxu0 0.0
        %552 = vmatpush1.msra.mxu0 0.0
        %553 = vmatprep.subr.mxu0 0.0
        %554 = vmatpush1.msra.mxu0 0.0
        %555 = vmatprep.subr.mxu0 0.0
        %556 = vmatpush1.msra.mxu0 0.0
        %557 = vmatprep.subr.mxu0 0.0
        %558 = vmatpush1.msra.mxu0 0.0
        %559 = vmatprep.subr.mxu0 0.0
        %560 = vmatpush1.msra.mxu0 0.0
        %561 = vmatprep.subr.mxu0 0.0
        %562 = vmatpush1.msra.mxu0 0.0
        %563 = vmatprep.subr.mxu0 0.0
        %564 = vmatpush1.msra.mxu0 0.0
        %565 = vmatprep.subr.mxu0 0.0
        %566 = vmatpush1.msra.mxu0 0.0
        %567 = vmatprep.subr.mxu0 0.0
        %568 = vmatpush1.msra.mxu0 0.0
        %569 = vmatprep.subr.mxu0 0.0
        %570 = vmatpush1.msra.mxu0 0.0
        %571 = vmatprep.subr.mxu0 0.0
        %572 = vmatpush1.msra.mxu0 0.0
        %573 = vmatprep.subr.mxu0 0.0
        %574 = vmatpush1.msra.mxu0 0.0
        %575 = vmatprep.subr.mxu0 0.0
        %576 = vmatpush1.msra.mxu0 0.0
        %577 = vmatprep.subr.mxu0 0.0
        %578 = vmatpush1.msra.mxu0 0.0
        %579 = vmatprep.subr.mxu0 0.0
        %580 = vmatpush1.msra.mxu0 0.0
        %581 = vmatprep.subr.mxu0 0.0
        %582 = vmatpush1.msra.mxu0 0.0
        %583 = vmatprep.subr.mxu0 0.0
        %584 = vmatpush1.msra.mxu0 0.0
        %585 = vmatprep.subr.mxu0 0.0
        %586 = vmatpush1.msra.mxu0 0.0
        %587 = vmatprep.subr.mxu0 0.0
        %588 = vmatpush1.msra.mxu0 0.0
        %589 = vmatprep.subr.mxu0 0.0
        %590 = vmatpush1.msra.mxu0 0.0
        %591 = vmatprep.subr.mxu0 0.0
        %592 = vmatpush1.msra.mxu0 0.0
        %593 = vmatprep.subr.mxu0 0.0
        %594 = vmatpush1.msra.mxu0 0.0
        %595 = vmatprep.subr.mxu0 0.0
        %596 = vmatpush1.msra.mxu0 0.0
        %597 = vmatprep.subr.mxu0 0.0
        %598 = vmatpush1.msra.mxu0 0.0
        %599 = vmatprep.subr.mxu0 0.0
        %600 = vmatpush1.msra.mxu0 0.0
        %601 = vmatprep.subr.mxu0 0.0
        %602 = vmatpush1.msra.mxu0 0.0
        %603 = vmatprep.subr.mxu0 0.0
        %604 = vmatpush1.msra.mxu0 0.0
        %605 = vmatprep.mubr.f32.mxu0 0.0
        %606 = vmatmul.mubr.f32.gmra.mrb[0].mxu0 %v539
        %v607 = vpop.f32.mrb[0].mxu0
        %v608 = vadd.f32 %v536, %v607
        %v609 = vpop.f32.mrb[0].mxu0
        %610 = vdwg.mxu0
        %v611 = vld [vmem:[%s5] sm:$0xff]
        %v612 = vmul.f32 %v608, %v611
        %vm613 = vcmask 1048064
        %614 = vrot.lane.b32.xlu0 %v608, 64
        %v615 = vpop.permute.xlu0 %614
        %v616 = vsel %vm613, %v615, %v608
        %617 = vrot.lane.b32.xlu0 %v616, 64
        %v618 = vpop.permute.xlu0 %617
        %v619 = vsel %vm613, %v618, %v608
        %v620 = vld [vmem:[#allocation5] sm:$0xff]
        %622 = vrot.lane.b32.xlu0 %v620, 1
        %v623 = vpop.permute.xlu0 %622
        %v625 = vmul.f32 %v619, %v623
        %627 = vrot.lane.b32.xlu0 %v625, 127
        %v628 = vpop.permute.xlu0 %627
        %v630 = vadd.f32 %v612, %v628
        %v631 = vld [vmem:[#allocation7] sm:$0xff]
        %633 = vrot.lane.b32.xlu0 %v631, 63
        %v634 = vpop.permute.xlu0 %633
        %v636 = vmul.f32 %v619, %v634
        %638 = vrot.lane.b32.xlu0 %v636, 65
        %v639 = vpop.permute.xlu0 %638
        %v641 = vadd.f32 %v630, %v639
        %v642 = vld [vmem:[#allocation8] sm:$0xff]
        %644 = vrot.lane.b32.xlu0 %v641, 96
        %v645 = vpop.permute.xlu0 %644
        %vm646 = vcmask 64512
        %v647 = vsel %vm646, %v641, 0
        %v649 = vsel %vm646, %v645, 0
        %651 = vmatprep.subr.mxu0 0.0
        %652 = vmatpush1.xpose.msra.mxu0 %v649
        %653 = vmatprep.subr.mxu0 0.0
        %654 = vmatpush1.xpose.msra.mxu0 0.0
        %655 = vmatprep.subr.mxu0 0.0
        %656 = vmatpush1.xpose.msra.mxu0 0.0
        %657 = vmatprep.subr.mxu0 0.0
        %658 = vmatpush1.xpose.msra.mxu0 0.0
        %659 = vmatprep.subr.mxu0 0.0
        %660 = vmatpush1.xpose.msra.mxu0 0.0
        %661 = vmatprep.subr.mxu0 0.0
        %662 = vmatpush1.xpose.msra.mxu0 0.0
        %663 = vmatprep.subr.mxu0 0.0
        %664 = vmatpush1.xpose.msra.mxu0 0.0
        %665 = vmatprep.subr.mxu0 0.0
        %666 = vmatpush1.xpose.msra.mxu0 0.0
        %667 = vmatprep.subr.mxu0 0.0
        %668 = vmatpush1.xpose.msra.mxu0 0.0
        %669 = vmatprep.subr.mxu0 0.0
        %670 = vmatpush1.xpose.msra.mxu0 0.0
        %671 = vmatprep.subr.mxu0 0.0
        %672 = vmatpush1.xpose.msra.mxu0 0.0
        %673 = vmatprep.subr.mxu0 0.0
        %674 = vmatpush1.xpose.msra.mxu0 0.0
        %675 = vmatprep.subr.mxu0 0.0
        %676 = vmatpush1.xpose.msra.mxu0 0.0
        %677 = vmatprep.subr.mxu0 0.0
        %678 = vmatpush1.xpose.msra.mxu0 0.0
        %679 = vmatprep.subr.mxu0 0.0
        %680 = vmatpush1.xpose.msra.mxu0 0.0
        %681 = vmatprep.subr.mxu0 0.0
        %682 = vmatpush1.xpose.msra.mxu0 0.0
        %683 = vmatprep.subr.mxu0 0.0
        %684 = vmatpush1.xpose.msra.mxu0 0.0
        %685 = vmatprep.subr.mxu0 0.0
        %686 = vmatpush1.xpose.msra.mxu0 0.0
        %687 = vmatprep.subr.mxu0 0.0
        %688 = vmatpush1.xpose.msra.mxu0 0.0
        %689 = vmatprep.subr.mxu0 0.0
        %690 = vmatpush1.xpose.msra.mxu0 0.0
        %691 = vmatprep.subr.mxu0 0.0
        %692 = vmatpush1.xpose.msra.mxu0 0.0
        %693 = vmatprep.subr.mxu0 0.0
        %694 = vmatpush1.xpose.msra.mxu0 0.0
        %695 = vmatprep.subr.mxu0 0.0
        %696 = vmatpush1.xpose.msra.mxu0 0.0
        %697 = vmatprep.subr.mxu0 0.0
        %698 = vmatpush1.xpose.msra.mxu0 0.0
        %699 = vmatprep.subr.mxu0 0.0
        %700 = vmatpush1.xpose.msra.mxu0 0.0
        %701 = vmatprep.subr.mxu0 0.0
        %702 = vmatpush1.xpose.msra.mxu0 0.0
        %703 = vmatprep.subr.mxu0 0.0
        %704 = vmatpush1.xpose.msra.mxu0 0.0
        %705 = vmatprep.subr.mxu0 0.0
        %706 = vmatpush1.xpose.msra.mxu0 0.0
        %707 = vmatprep.subr.mxu0 0.0
        %708 = vmatpush1.xpose.msra.mxu0 0.0
        %709 = vmatprep.subr.mxu0 0.0
        %710 = vmatpush1.xpose.msra.mxu0 0.0
        %711 = vmatprep.subr.mxu0 0.0
        %712 = vmatpush1.xpose.msra.mxu0 0.0
        %713 = vmatprep.subr.mxu0 0.0
        %714 = vmatpush1.xpose.msra.mxu0 0.0
        %715 = vmatprep.mubr.f32.mxu0 0.0
        %716 = vmatmul.mubr.f32.gmra.mrb[0].mxu0 %v647
        %v717 = vpop.f32.mrb[0].mxu0
        %v718 = vadd.f32 %v642, %v717
        %v719 = vpop.f32.mrb[0].mxu0
        %720 = vdwg.mxu0
        %v721 = vsel %vm646, %v718, -inf
        %722 = vmax.xlane.f32.xlu0 %v721
        %v723 = vpop.xlane.xlu0 %722
        %v724 = vsub.f32 %v718, %v723
        %v725 = vmul.f32 %v724, 1.442695
        %v726 = vpow.pop %v725
        %v727 = vsel %vm646, %v726, 0.0
        %728 = vadd.xlane.f32.xlu0 %v727
        %v729 = vpop.xlane.xlu0 %728
        %v730 = vrcp.pop %v729
        %v731 = vmul.f32 %v726, %v730
        %732 = vrot.lane.b32.xlu0 %v641, 80
        %v733 = vpop.permute.xlu0 %732
        %v736 = vsel %vm646, %v731, 0
        %738 = vmatprep.subr.mxu0 0.0
        %739 = vmatpush1.msra.mxu0 %v733
        %740 = vmatprep.subr.mxu0 0.0
        %741 = vmatpush1.msra.mxu0 0.0
        %742 = vmatprep.subr.mxu0 0.0
        %743 = vmatpush1.msra.mxu0 0.0
        %744 = vmatprep.subr.mxu0 0.0
        %745 = vmatpush1.msra.mxu0 0.0
        %746 = vmatprep.subr.mxu0 0.0
        %747 = vmatpush1.msra.mxu0 0.0
        %748 = vmatprep.subr.mxu0 0.0
        %749 = vmatpush1.msra.mxu0 0.0
        %750 = vmatprep.subr.mxu0 0.0
        %751 = vmatpush1.msra.mxu0 0.0
        %752 = vmatprep.subr.mxu0 0.0
        %753 = vmatpush1.msra.mxu0 0.0
        %754 = vmatprep.subr.mxu0 0.0
        %755 = vmatpush1.msra.mxu0 0.0
        %756 = vmatprep.subr.mxu0 0.0
        %757 = vmatpush1.msra.mxu0 0.0
        %758 = vmatprep.subr.mxu0 0.0
        %759 = vmatpush1.msra.mxu0 0.0
        %760 = vmatprep.subr.mxu0 0.0
        %761 = vmatpush1.msra.mxu0 0.0
        %762 = vmatprep.subr.mxu0 0.0
        %763 = vmatpush1.msra.mxu0 0.0
        %764 = vmatprep.subr.mxu0 0.0
        %765 = vmatpush1.msra.mxu0 0.0
        %766 = vmatprep.subr.mxu0 0.0
        %767 = vmatpush1.msra.mxu0 0.0
        %768 = vmatprep.subr.mxu0 0.0
        %769 = vmatpush1.msra.mxu0 0.0
        %770 = vmatprep.subr.mxu0 0.0
        %771 = vmatpush1.msra.mxu0 0.0
        %772 = vmatprep.subr.mxu0 0.0
        %773 = vmatpush1.msra.mxu0 0.0
        %774 = vmatprep.subr.mxu0 0.0
        %775 = vmatpush1.msra.mxu0 0.0
        %776 = vmatprep.subr.mxu0 0.0
        %777 = vmatpush1.msra.mxu0 0.0
        %778 = vmatprep.subr.mxu0 0.0
        %779 = vmatpush1.msra.mxu0 0.0
        %780 = vmatprep.subr.mxu0 0.0
        %781 = vmatpush1.msra.mxu0 0.0
        %782 = vmatprep.subr.mxu0 0.0
        %783 = vmatpush1.msra.mxu0 0.0
        %784 = vmatprep.subr.mxu0 0.0
        %785 = vmatpush1.msra.mxu0 0.0
        %786 = vmatprep.subr.mxu0 0.0
        %787 = vmatpush1.msra.mxu0 0.0
        %788 = vmatprep.subr.mxu0 0.0
        %789 = vmatpush1.msra.mxu0 0.0
        %790 = vmatprep.subr.mxu0 0.0
        %791 = vmatpush1.msra.mxu0 0.0
        %792 = vmatprep.subr.mxu0 0.0
        %793 = vmatpush1.msra.mxu0 0.0
        %794 = vmatprep.subr.mxu0 0.0
        %795 = vmatpush1.msra.mxu0 0.0
        %796 = vmatprep.subr.mxu0 0.0
        %797 = vmatpush1.msra.mxu0 0.0
        %798 = vmatprep.subr.mxu0 0.0
        %799 = vmatpush1.msra.mxu0 0.0
        %800 = vmatprep.subr.mxu0 0.0
        %801 = vmatpush1.msra.mxu0 0.0
        %802 = vmatprep.mubr.f32.mxu0 0.0
        %803 = vmatmul.mubr.f32.gmra.mrb[0].mxu0 %v736
        %v804 = vpop.f32.mrb[0].mxu0
        %v805 = vadd.f32 0.0, %v804
        %v806 = vpop.f32.mrb[0].mxu0
        %807 = vdwg.mxu0
        %808 = vrot.lane.b32.xlu0 %v641, 120
        %v809 = vpop.permute.xlu0 %808
        %v810 = vsel %vm646, %v809, 0
        %812 = vmatprep.subr.mxu0 0.0
        %813 = vmatpush1.xpose.msra.mxu0 %v649
        %814 = vmatprep.subr.mxu0 0.0
        %815 = vmatpush1.xpose.msra.mxu0 0.0
        %816 = vmatprep.subr.mxu0 0.0
        %817 = vmatpush1.xpose.msra.mxu0 0.0
        %818 = vmatprep.subr.mxu0 0.0
        %819 = vmatpush1.xpose.msra.mxu0 0.0
        %820 = vmatprep.subr.mxu0 0.0
        %821 = vmatpush1.xpose.msra.mxu0 0.0
        %822 = vmatprep.subr.mxu0 0.0
        %823 = vmatpush1.xpose.msra.mxu0 0.0
        %824 = vmatprep.subr.mxu0 0.0
        %825 = vmatpush1.xpose.msra.mxu0 0.0
        %826 = vmatprep.subr.mxu0 0.0
        %827 = vmatpush1.xpose.msra.mxu0 0.0
        %828 = vmatprep.subr.mxu0 0.0
        %829 = vmatpush1.xpose.msra.mxu0 0.0
        %830 = vmatprep.subr.mxu0 0.0
        %831 = vmatpush1.xpose.msra.mxu0 0.0
        %832 = vmatprep.subr.mxu0 0.0
        %833 = vmatpush1.xpose.msra.mxu0 0.0
        %834 = vmatprep.subr.mxu0 0.0
        %835 = vmatpush1.xpose.msra.mxu0 0.0
        %836 = vmatprep.subr.mxu0 0.0
        %837 = vmatpush1.xpose.msra.mxu0 0.0
        %838 = vmatprep.subr.mxu0 0.0
        %839 = vmatpush1.xpose.msra.mxu0 0.0
        %840 = vmatprep.subr.mxu0 0.0
        %841 = vmatpush1.xpose.msra.mxu0 0.0
        %842 = vmatprep.subr.mxu0 0.0
        %843 = vmatpush1.xpose.msra.mxu0 0.0
        %844 = vmatprep.subr.mxu0 0.0
        %845 = vmatpush1.xpose.msra.mxu0 0.0
        %846 = vmatprep.subr.mxu0 0.0
        %847 = vmatpush1.xpose.msra.mxu0 0.0
        %848 = vmatprep.subr.mxu0 0.0
        %849 = vmatpush1.xpose.msra.mxu0 0.0
        %850 = vmatprep.subr.mxu0 0.0
        %851 = vmatpush1.xpose.msra.mxu0 0.0
        %852 = vmatprep.subr.mxu0 0.0
        %853 = vmatpush1.xpose.msra.mxu0 0.0
        %854 = vmatprep.subr.mxu0 0.0
        %855 = vmatpush1.xpose.msra.mxu0 0.0
        %856 = vmatprep.subr.mxu0 0.0
        %857 = vmatpush1.xpose.msra.mxu0 0.0
        %858 = vmatprep.subr.mxu0 0.0
        %859 = vmatpush1.xpose.msra.mxu0 0.0
        %860 = vmatprep.subr.mxu0 0.0
        %861 = vmatpush1.xpose.msra.mxu0 0.0
        %862 = vmatprep.subr.mxu0 0.0
        %863 = vmatpush1.xpose.msra.mxu0 0.0
        %864 = vmatprep.subr.mxu0 0.0
        %865 = vmatpush1.xpose.msra.mxu0 0.0
        %866 = vmatprep.subr.mxu0 0.0
        %867 = vmatpush1.xpose.msra.mxu0 0.0
        %868 = vmatprep.subr.mxu0 0.0
        %869 = vmatpush1.xpose.msra.mxu0 0.0
        %870 = vmatprep.subr.mxu0 0.0
        %871 = vmatpush1.xpose.msra.mxu0 0.0
        %872 = vmatprep.subr.mxu0 0.0
        %873 = vmatpush1.xpose.msra.mxu0 0.0
        %874 = vmatprep.subr.mxu0 0.0
        %875 = vmatpush1.xpose.msra.mxu0 0.0
        %876 = vmatprep.mubr.f32.mxu0 0.0
        %877 = vmatmul.mubr.f32.gmra.mrb[0].mxu0 %v810
        %v878 = vpop.f32.mrb[0].mxu0
        %v879 = vadd.f32 %v642, %v878
        %v880 = vpop.f32.mrb[0].mxu0
        %881 = vdwg.mxu0
        %v882 = vsel %vm646, %v879, -inf
        %883 = vmax.xlane.f32.xlu0 %v882
        %v884 = vpop.xlane.xlu0 %883
        %v885 = vsub.f32 %v879, %v884
        %v886 = vmul.f32 %v885, 1.442695
        %v887 = vpow.pop %v886
        %v888 = vsel %vm646, %v887, 0.0
        %889 = vadd.xlane.f32.xlu0 %v888
        %v890 = vpop.xlane.xlu0 %889
        %v891 = vrcp.pop %v890
        %v892 = vmul.f32 %v887, %v891
        %v894 = vsel %vm646, %v892, 0
        %896 = vmatprep.subr.mxu0 0.0
        %897 = vmatpush1.msra.mxu0 %v733
        %898 = vmatprep.subr.mxu0 0.0
        %899 = vmatpush1.msra.mxu0 0.0
        %900 = vmatprep.subr.mxu0 0.0
        %901 = vmatpush1.msra.mxu0 0.0
        %902 = vmatprep.subr.mxu0 0.0
        %903 = vmatpush1.msra.mxu0 0.0
        %904 = vmatprep.subr.mxu0 0.0
        %905 = vmatpush1.msra.mxu0 0.0
        %906 = vmatprep.subr.mxu0 0.0
        %907 = vmatpush1.msra.mxu0 0.0
        %908 = vmatprep.subr.mxu0 0.0
        %909 = vmatpush1.msra.mxu0 0.0
        %910 = vmatprep.subr.mxu0 0.0
        %911 = vmatpush1.msra.mxu0 0.0
        %912 = vmatprep.subr.mxu0 0.0
        %913 = vmatpush1.msra.mxu0 0.0
        %914 = vmatprep.subr.mxu0 0.0
        %915 = vmatpush1.msra.mxu0 0.0
        %916 = vmatprep.subr.mxu0 0.0
        %917 = vmatpush1.msra.mxu0 0.0
        %918 = vmatprep.subr.mxu0 0.0
        %919 = vmatpush1.msra.mxu0 0.0
        %920 = vmatprep.subr.mxu0 0.0
        %921 = vmatpush1.msra.mxu0 0.0
        %922 = vmatprep.subr.mxu0 0.0
        %923 = vmatpush1.msra.mxu0 0.0
        %924 = vmatprep.subr.mxu0 0.0
        %925 = vmatpush1.msra.mxu0 0.0
        %926 = vmatprep.subr.mxu0 0.0
        %927 = vmatpush1.msra.mxu0 0.0
        %928 = vmatprep.subr.mxu0 0.0
        %929 = vmatpush1.msra.mxu0 0.0
        %930 = vmatprep.subr.mxu0 0.0
        %931 = vmatpush1.msra.mxu0 0.0
        %932 = vmatprep.subr.mxu0 0.0
        %933 = vmatpush1.msra.mxu0 0.0
        %934 = vmatprep.subr.mxu0 0.0
        %935 = vmatpush1.msra.mxu0 0.0
        %936 = vmatprep.subr.mxu0 0.0
        %937 = vmatpush1.msra.mxu0 0.0
        %938 = vmatprep.subr.mxu0 0.0
        %939 = vmatpush1.msra.mxu0 0.0
        %940 = vmatprep.subr.mxu0 0.0
        %941 = vmatpush1.msra.mxu0 0.0
        %942 = vmatprep.subr.mxu0 0.0
        %943 = vmatpush1.msra.mxu0 0.0
        %944 = vmatprep.subr.mxu0 0.0
        %945 = vmatpush1.msra.mxu0 0.0
        %946 = vmatprep.subr.mxu0 0.0
        %947 = vmatpush1.msra.mxu0 0.0
        %948 = vmatprep.subr.mxu0 0.0
        %949 = vmatpush1.msra.mxu0 0.0
        %950 = vmatprep.subr.mxu0 0.0
        %951 = vmatpush1.msra.mxu0 0.0
        %952 = vmatprep.subr.mxu0 0.0
        %953 = vmatpush1.msra.mxu0 0.0
        %954 = vmatprep.subr.mxu0 0.0
        %955 = vmatpush1.msra.mxu0 0.0
        %956 = vmatprep.subr.mxu0 0.0
        %957 = vmatpush1.msra.mxu0 0.0
        %958 = vmatprep.subr.mxu0 0.0
        %959 = vmatpush1.msra.mxu0 0.0
        %960 = vmatprep.mubr.f32.mxu0 0.0
        %961 = vmatmul.mubr.f32.gmra.mrb[0].mxu0 %v894
        %v962 = vpop.f32.mrb[0].mxu0
        %v963 = vadd.f32 0.0, %v962
        %v964 = vpop.f32.mrb[0].mxu0
        %965 = vdwg.mxu0
        %966 = vrot.lane.b32.xlu0 %v641, 112
        %v967 = vpop.permute.xlu0 %966
        %968 = vrot.lane.b32.xlu0 %v641, 88
        %v969 = vpop.permute.xlu0 %968
        %v970 = vsel %vm646, %v967, 0
        %v972 = vsel %vm646, %v969, 0
        %974 = vmatprep.subr.mxu0 0.0
        %975 = vmatpush1.xpose.msra.mxu0 %v972
        %976 = vmatprep.subr.mxu0 0.0
        %977 = vmatpush1.xpose.msra.mxu0 0.0
        %978 = vmatprep.subr.mxu0 0.0
        %979 = vmatpush1.xpose.msra.mxu0 0.0
        %980 = vmatprep.subr.mxu0 0.0
        %981 = vmatpush1.xpose.msra.mxu0 0.0
        %982 = vmatprep.subr.mxu0 0.0
        %983 = vmatpush1.xpose.msra.mxu0 0.0
        %984 = vmatprep.subr.mxu0 0.0
        %985 = vmatpush1.xpose.msra.mxu0 0.0
        %986 = vmatprep.subr.mxu0 0.0
        %987 = vmatpush1.xpose.msra.mxu0 0.0
        %988 = vmatprep.subr.mxu0 0.0
        %989 = vmatpush1.xpose.msra.mxu0 0.0
        %990 = vmatprep.subr.mxu0 0.0
        %991 = vmatpush1.xpose.msra.mxu0 0.0
        %992 = vmatprep.subr.mxu0 0.0
        %993 = vmatpush1.xpose.msra.mxu0 0.0
        %994 = vmatprep.subr.mxu0 0.0
        %995 = vmatpush1.xpose.msra.mxu0 0.0
        %996 = vmatprep.subr.mxu0 0.0
        %997 = vmatpush1.xpose.msra.mxu0 0.0
        %998 = vmatprep.subr.mxu0 0.0
        %999 = vmatpush1.xpose.msra.mxu0 0.0
        %1000 = vmatprep.subr.mxu0 0.0
        %1001 = vmatpush1.xpose.msra.mxu0 0.0
        %1002 = vmatprep.subr.mxu0 0.0
        %1003 = vmatpush1.xpose.msra.mxu0 0.0
        %1004 = vmatprep.subr.mxu0 0.0
        %1005 = vmatpush1.xpose.msra.mxu0 0.0
        %1006 = vmatprep.subr.mxu0 0.0
        %1007 = vmatpush1.xpose.msra.mxu0 0.0
        %1008 = vmatprep.subr.mxu0 0.0
        %1009 = vmatpush1.xpose.msra.mxu0 0.0
        %1010 = vmatprep.subr.mxu0 0.0
        %1011 = vmatpush1.xpose.msra.mxu0 0.0
        %1012 = vmatprep.subr.mxu0 0.0
        %1013 = vmatpush1.xpose.msra.mxu0 0.0
        %1014 = vmatprep.subr.mxu0 0.0
        %1015 = vmatpush1.xpose.msra.mxu0 0.0
        %1016 = vmatprep.subr.mxu0 0.0
        %1017 = vmatpush1.xpose.msra.mxu0 0.0
        %1018 = vmatprep.subr.mxu0 0.0
        %1019 = vmatpush1.xpose.msra.mxu0 0.0
        %1020 = vmatprep.subr.mxu0 0.0
        %1021 = vmatpush1.xpose.msra.mxu0 0.0
        %1022 = vmatprep.subr.mxu0 0.0
        %1023 = vmatpush1.xpose.msra.mxu0 0.0
        %1024 = vmatprep.subr.mxu0 0.0
        %1025 = vmatpush1.xpose.msra.mxu0 0.0
        %1026 = vmatprep.subr.mxu0 0.0
        %1027 = vmatpush1.xpose.msra.mxu0 0.0
        %1028 = vmatprep.subr.mxu0 0.0
        %1029 = vmatpush1.xpose.msra.mxu0 0.0
        %1030 = vmatprep.subr.mxu0 0.0
        %1031 = vmatpush1.xpose.msra.mxu0 0.0
        %1032 = vmatprep.subr.mxu0 0.0
        %1033 = vmatpush1.xpose.msra.mxu0 0.0
        %1034 = vmatprep.subr.mxu0 0.0
        %1035 = vmatpush1.xpose.msra.mxu0 0.0
        %1036 = vmatprep.subr.mxu0 0.0
        %1037 = vmatpush1.xpose.msra.mxu0 0.0
        %1038 = vmatprep.mubr.f32.mxu0 0.0
        %1039 = vmatmul.mubr.f32.gmra.mrb[0].mxu0 %v970
        %v1040 = vpop.f32.mrb[0].mxu0
        %v1041 = vadd.f32 %v642, %v1040
        %v1042 = vpop.f32.mrb[0].mxu0
        %1043 = vdwg.mxu0
        %v1044 = vsel %vm646, %v1041, -inf
        %1045 = vmax.xlane.f32.xlu0 %v1044
        %v1046 = vpop.xlane.xlu0 %1045
        %v1047 = vsub.f32 %v1041, %v1046
        %v1048 = vmul.f32 %v1047, 1.442695
        %v1049 = vpow.pop %v1048
        %v1050 = vsel %vm646, %v1049, 0.0
        %1051 = vadd.xlane.f32.xlu0 %v1050
        %v1052 = vpop.xlane.xlu0 %1051
        %v1053 = vrcp.pop %v1052
        %v1054 = vmul.f32 %v1049, %v1053
        %1055 = vrot.lane.b32.xlu0 %v641, 72
        %v1056 = vpop.permute.xlu0 %1055
        %v1059 = vsel %vm646, %v1054, 0
        %1061 = vmatprep.subr.mxu0 0.0
        %1062 = vmatpush1.msra.mxu0 %v1056
        %1063 = vmatprep.subr.mxu0 0.0
        %1064 = vmatpush1.msra.mxu0 0.0
        %1065 = vmatprep.subr.mxu0 0.0
        %1066 = vmatpush1.msra.mxu0 0.0
        %1067 = vmatprep.subr.mxu0 0.0
        %1068 = vmatpush1.msra.mxu0 0.0
        %1069 = vmatprep.subr.mxu0 0.0
        %1070 = vmatpush1.msra.mxu0 0.0
        %1071 = vmatprep.subr.mxu0 0.0
        %1072 = vmatpush1.msra.mxu0 0.0
        %1073 = vmatprep.subr.mxu0 0.0
        %1074 = vmatpush1.msra.mxu0 0.0
        %1075 = vmatprep.subr.mxu0 0.0
        %1076 = vmatpush1.msra.mxu0 0.0
        %1077 = vmatprep.subr.mxu0 0.0
        %1078 = vmatpush1.msra.mxu0 0.0
        %1079 = vmatprep.subr.mxu0 0.0
        %1080 = vmatpush1.msra.mxu0 0.0
        %1081 = vmatprep.subr.mxu0 0.0
        %1082 = vmatpush1.msra.mxu0 0.0
        %1083 = vmatprep.subr.mxu0 0.0
        %1084 = vmatpush1.msra.mxu0 0.0
        %1085 = vmatprep.subr.mxu0 0.0
        %1086 = vmatpush1.msra.mxu0 0.0
        %1087 = vmatprep.subr.mxu0 0.0
        %1088 = vmatpush1.msra.mxu0 0.0
        %1089 = vmatprep.subr.mxu0 0.0
        %1090 = vmatpush1.msra.mxu0 0.0
        %1091 = vmatprep.subr.mxu0 0.0
        %1092 = vmatpush1.msra.mxu0 0.0
        %1093 = vmatprep.subr.mxu0 0.0
        %1094 = vmatpush1.msra.mxu0 0.0
        %1095 = vmatprep.subr.mxu0 0.0
        %1096 = vmatpush1.msra.mxu0 0.0
        %1097 = vmatprep.subr.mxu0 0.0
        %1098 = vmatpush1.msra.mxu0 0.0
        %1099 = vmatprep.subr.mxu0 0.0
        %1100 = vmatpush1.msra.mxu0 0.0
        %1101 = vmatprep.subr.mxu0 0.0
        %1102 = vmatpush1.msra.mxu0 0.0
        %1103 = vmatprep.subr.mxu0 0.0
        %1104 = vmatpush1.msra.mxu0 0.0
        %1105 = vmatprep.subr.mxu0 0.0
        %1106 = vmatpush1.msra.mxu0 0.0
        %1107 = vmatprep.subr.mxu0 0.0
        %1108 = vmatpush1.msra.mxu0 0.0
        %1109 = vmatprep.subr.mxu0 0.0
        %1110 = vmatpush1.msra.mxu0 0.0
        %1111 = vmatprep.subr.mxu0 0.0
        %1112 = vmatpush1.msra.mxu0 0.0
        %1113 = vmatprep.subr.mxu0 0.0
        %1114 = vmatpush1.msra.mxu0 0.0
        %1115 = vmatprep.subr.mxu0 0.0
        %1116 = vmatpush1.msra.mxu0 0.0
        %1117 = vmatprep.subr.mxu0 0.0
        %1118 = vmatpush1.msra.mxu0 0.0
        %1119 = vmatprep.subr.mxu0 0.0
        %1120 = vmatpush1.msra.mxu0 0.0
        %1121 = vmatprep.subr.mxu0 0.0
        %1122 = vmatpush1.msra.mxu0 0.0
        %1123 = vmatprep.subr.mxu0 0.0
        %1124 = vmatpush1.msra.mxu0 0.0
        %1125 = vmatprep.mubr.f32.mxu0 0.0
        %1126 = vmatmul.mubr.f32.gmra.mrb[0].mxu0 %v1059
        %v1127 = vpop.f32.mrb[0].mxu0
        %v1128 = vadd.f32 0.0, %v1127
        %v1129 = vpop.f32.mrb[0].mxu0
        %1130 = vdwg.mxu0
        %1131 = vrot.lane.b32.xlu0 %v641, 104
        %v1132 = vpop.permute.xlu0 %1131
        %v1133 = vsel %vm646, %v1132, 0
        %1135 = vmatprep.subr.mxu0 0.0
        %1136 = vmatpush1.xpose.msra.mxu0 %v972
        %1137 = vmatprep.subr.mxu0 0.0
        %1138 = vmatpush1.xpose.msra.mxu0 0.0
        %1139 = vmatprep.subr.mxu0 0.0
        %1140 = vmatpush1.xpose.msra.mxu0 0.0
        %1141 = vmatprep.subr.mxu0 0.0
        %1142 = vmatpush1.xpose.msra.mxu0 0.0
        %1143 = vmatprep.subr.mxu0 0.0
        %1144 = vmatpush1.xpose.msra.mxu0 0.0
        %1145 = vmatprep.subr.mxu0 0.0
        %1146 = vmatpush1.xpose.msra.mxu0 0.0
        %1147 = vmatprep.subr.mxu0 0.0
        %1148 = vmatpush1.xpose.msra.mxu0 0.0
        %1149 = vmatprep.subr.mxu0 0.0
        %1150 = vmatpush1.xpose.msra.mxu0 0.0
        %1151 = vmatprep.subr.mxu0 0.0
        %1152 = vmatpush1.xpose.msra.mxu0 0.0
        %1153 = vmatprep.subr.mxu0 0.0
        %1154 = vmatpush1.xpose.msra.mxu0 0.0
        %1155 = vmatprep.subr.mxu0 0.0
        %1156 = vmatpush1.xpose.msra.mxu0 0.0
        %1157 = vmatprep.subr.mxu0 0.0
        %1158 = vmatpush1.xpose.msra.mxu0 0.0
        %1159 = vmatprep.subr.mxu0 0.0
        %1160 = vmatpush1.xpose.msra.mxu0 0.0
        %1161 = vmatprep.subr.mxu0 0.0
        %1162 = vmatpush1.xpose.msra.mxu0 0.0
        %1163 = vmatprep.subr.mxu0 0.0
        %1164 = vmatpush1.xpose.msra.mxu0 0.0
        %1165 = vmatprep.subr.mxu0 0.0
        %1166 = vmatpush1.xpose.msra.mxu0 0.0
        %1167 = vmatprep.subr.mxu0 0.0
        %1168 = vmatpush1.xpose.msra.mxu0 0.0
        %1169 = vmatprep.subr.mxu0 0.0
        %1170 = vmatpush1.xpose.msra.mxu0 0.0
        %1171 = vmatprep.subr.mxu0 0.0
        %1172 = vmatpush1.xpose.msra.mxu0 0.0
        %1173 = vmatprep.subr.mxu0 0.0
        %1174 = vmatpush1.xpose.msra.mxu0 0.0
        %1175 = vmatprep.subr.mxu0 0.0
        %1176 = vmatpush1.xpose.msra.mxu0 0.0
        %1177 = vmatprep.subr.mxu0 0.0
        %1178 = vmatpush1.xpose.msra.mxu0 0.0
        %1179 = vmatprep.subr.mxu0 0.0
        %1180 = vmatpush1.xpose.msra.mxu0 0.0
        %1181 = vmatprep.subr.mxu0 0.0
        %1182 = vmatpush1.xpose.msra.mxu0 0.0
        %1183 = vmatprep.subr.mxu0 0.0
        %1184 = vmatpush1.xpose.msra.mxu0 0.0
        %1185 = vmatprep.subr.mxu0 0.0
        %1186 = vmatpush1.xpose.msra.mxu0 0.0
        %1187 = vmatprep.subr.mxu0 0.0
        %1188 = vmatpush1.xpose.msra.mxu0 0.0
        %1189 = vmatprep.subr.mxu0 0.0
        %1190 = vmatpush1.xpose.msra.mxu0 0.0
        %1191 = vmatprep.subr.mxu0 0.0
        %1192 = vmatpush1.xpose.msra.mxu0 0.0
        %1193 = vmatprep.subr.mxu0 0.0
        %1194 = vmatpush1.xpose.msra.mxu0 0.0
        %1195 = vmatprep.subr.mxu0 0.0
        %1196 = vmatpush1.xpose.msra.mxu0 0.0
        %1197 = vmatprep.subr.mxu0 0.0
        %1198 = vmatpush1.xpose.msra.mxu0 0.0
        %1199 = vmatprep.mubr.f32.mxu0 0.0
        %1200 = vmatmul.mubr.f32.gmra.mrb[0].mxu0 %v1133
        %v1201 = vpop.f32.mrb[0].mxu0
        %v1202 = vadd.f32 %v642, %v1201
        %v1203 = vpop.f32.mrb[0].mxu0
        %1204 = vdwg.mxu0
        %v1205 = vsel %vm646, %v1202, -inf
        %1206 = vmax.xlane.f32.xlu0 %v1205
        %v1207 = vpop.xlane.xlu0 %1206
        %v1208 = vsub.f32 %v1202, %v1207
        %v1209 = vmul.f32 %v1208, 1.442695
        %v1210 = vpow.pop %v1209
        %v1211 = vsel %vm646, %v1210, 0.0
        %1212 = vadd.xlane.f32.xlu0 %v1211
        %v1213 = vpop.xlane.xlu0 %1212
        %v1214 = vrcp.pop %v1213
        %v1215 = vmul.f32 %v1210, %v1214
        %v1217 = vsel %vm646, %v1215, 0
        %1219 = vmatprep.subr.mxu0 0.0
        %1220 = vmatpush1.msra.mxu0 %v1056
        %1221 = vmatprep.subr.mxu0 0.0
        %1222 = vmatpush1.msra.mxu0 0.0
        %1223 = vmatprep.subr.mxu0 0.0
        %1224 = vmatpush1.msra.mxu0 0.0
        %1225 = vmatprep.subr.mxu0 0.0
        %1226 = vmatpush1.msra.mxu0 0.0
        %1227 = vmatprep.subr.mxu0 0.0
        %1228 = vmatpush1.msra.mxu0 0.0
        %1229 = vmatprep.subr.mxu0 0.0
        %1230 = vmatpush1.msra.mxu0 0.0
        %1231 = vmatprep.subr.mxu0 0.0
        %1232 = vmatpush1.msra.mxu0 0.0
        %1233 = vmatprep.subr.mxu0 0.0
        %1234 = vmatpush1.msra.mxu0 0.0
        %1235 = vmatprep.subr.mxu0 0.0
        %1236 = vmatpush1.msra.mxu0 0.0
        %1237 = vmatprep.subr.mxu0 0.0
        %1238 = vmatpush1.msra.mxu0 0.0
        %1239 = vmatprep.subr.mxu0 0.0
        %1240 = vmatpush1.msra.mxu0 0.0
        %1241 = vmatprep.subr.mxu0 0.0
        %1242 = vmatpush1.msra.mxu0 0.0
        %1243 = vmatprep.subr.mxu0 0.0
        %1244 = vmatpush1.msra.mxu0 0.0
        %1245 = vmatprep.subr.mxu0 0.0
        %1246 = vmatpush1.msra.mxu0 0.0
        %1247 = vmatprep.subr.mxu0 0.0
        %1248 = vmatpush1.msra.mxu0 0.0
        %1249 = vmatprep.subr.mxu0 0.0
        %1250 = vmatpush1.msra.mxu0 0.0
        %1251 = vmatprep.subr.mxu0 0.0
        %1252 = vmatpush1.msra.mxu0 0.0
        %1253 = vmatprep.subr.mxu0 0.0
        %1254 = vmatpush1.msra.mxu0 0.0
        %1255 = vmatprep.subr.mxu0 0.0
        %1256 = vmatpush1.msra.mxu0 0.0
        %1257 = vmatprep.subr.mxu0 0.0
        %1258 = vmatpush1.msra.mxu0 0.0
        %1259 = vmatprep.subr.mxu0 0.0
        %1260 = vmatpush1.msra.mxu0 0.0
        %1261 = vmatprep.subr.mxu0 0.0
        %1262 = vmatpush1.msra.mxu0 0.0
        %1263 = vmatprep.subr.mxu0 0.0
        %1264 = vmatpush1.msra.mxu0 0.0
        %1265 = vmatprep.subr.mxu0 0.0
        %1266 = vmatpush1.msra.mxu0 0.0
        %1267 = vmatprep.subr.mxu0 0.0
        %1268 = vmatpush1.msra.mxu0 0.0
        %1269 = vmatprep.subr.mxu0 0.0
        %1270 = vmatpush1.msra.mxu0 0.0
        %1271 = vmatprep.subr.mxu0 0.0
        %1272 = vmatpush1.msra.mxu0 0.0
        %1273 = vmatprep.subr.mxu0 0.0
        %1274 = vmatpush1.msra.mxu0 0.0
        %1275 = vmatprep.subr.mxu0 0.0
        %1276 = vmatpush1.msra.mxu0 0.0
        %1277 = vmatprep.subr.mxu0 0.0
        %1278 = vmatpush1.msra.mxu0 0.0
        %1279 = vmatprep.subr.mxu0 0.0
        %1280 = vmatpush1.msra.mxu0 0.0
        %1281 = vmatprep.subr.mxu0 0.0
        %1282 = vmatpush1.msra.mxu0 0.0
        %1283 = vmatprep.mubr.f32.mxu0 0.0
        %1284 = vmatmul.mubr.f32.gmra.mrb[0].mxu0 %v1217
        %v1285 = vpop.f32.mrb[0].mxu0
        %v1286 = vadd.f32 0.0, %v1285
        %v1287 = vpop.f32.mrb[0].mxu0
        %1288 = vdwg.mxu0
        %1290 = vrot.lane.b32.xlu0 %v963, 8
        %v1291 = vpop.permute.xlu0 %1290
        %1294 = vrot.lane.b32.xlu0 %v1128, 16
        %v1295 = vpop.permute.xlu0 %1294
        %1298 = vrot.lane.b32.xlu0 %v1286, 24
        %v1299 = vpop.permute.xlu0 %1298
        %v1301 = vsel %vm646, %v805, %v1291
        %vm1302 = vcmask 130048
        %v1303 = vsel %vm1302, %v1301, %v1295
        %vm1304 = vcmask 195584
        %v1305 = vsel %vm1304, %v1303, %v1299
        %v1306 = vld [vmem:[%s9] sm:$0xff]
        %v1307 = vld [vmem:[%s9 + $0x8] sm:$0xff]
        %v1308 = vld [vmem:[%s9 + $0x10] sm:$0xff]
        %v1309 = vld [vmem:[%s9 + $0x18] sm:$0xff]
        %v1311 = vsel %vm510, %v1305, 0
        %1313 = vmatprep.subr.mxu0 0.0
        %1314 = vmatpush1.msra.mxu0 %v1306
        %1315 = vmatprep.subr.mxu0 0.0
        %1316 = vmatpush1.msra.mxu0 %v1307
        %1317 = vmatprep.subr.mxu0 0.0
        %1318 = vmatpush1.msra.mxu0 %v1308
        %1319 = vmatprep.subr.mxu0 0.0
        %1320 = vmatpush1.msra.mxu0 %v1309
        %1321 = vmatprep.subr.mxu0 0.0
        %1322 = vmatpush1.msra.mxu0 0.0
        %1323 = vmatprep.subr.mxu0 0.0
        %1324 = vmatpush1.msra.mxu0 0.0
        %1325 = vmatprep.subr.mxu0 0.0
        %1326 = vmatpush1.msra.mxu0 0.0
        %1327 = vmatprep.subr.mxu0 0.0
        %1328 = vmatpush1.msra.mxu0 0.0
        %1329 = vmatprep.subr.mxu0 0.0
        %1330 = vmatpush1.msra.mxu0 0.0
        %1331 = vmatprep.subr.mxu0 0.0
        %1332 = vmatpush1.msra.mxu0 0.0
        %1333 = vmatprep.subr.mxu0 0.0
        %1334 = vmatpush1.msra.mxu0 0.0
        %1335 = vmatprep.subr.mxu0 0.0
        %1336 = vmatpush1.msra.mxu0 0.0
        %1337 = vmatprep.subr.mxu0 0.0
        %1338 = vmatpush1.msra.mxu0 0.0
        %1339 = vmatprep.subr.mxu0 0.0
        %1340 = vmatpush1.msra.mxu0 0.0
        %1341 = vmatprep.subr.mxu0 0.0
        %1342 = vmatpush1.msra.mxu0 0.0
        %1343 = vmatprep.subr.mxu0 0.0
        %1344 = vmatpush1.msra.mxu0 0.0
        %1345 = vmatprep.subr.mxu0 0.0
        %1346 = vmatpush1.msra.mxu0 0.0
        %1347 = vmatprep.subr.mxu0 0.0
        %1348 = vmatpush1.msra.mxu0 0.0
        %1349 = vmatprep.subr.mxu0 0.0
        %1350 = vmatpush1.msra.mxu0 0.0
        %1351 = vmatprep.subr.mxu0 0.0
        %1352 = vmatpush1.msra.mxu0 0.0
        %1353 = vmatprep.subr.mxu0 0.0
        %1354 = vmatpush1.msra.mxu0 0.0
        %1355 = vmatprep.subr.mxu0 0.0
        %1356 = vmatpush1.msra.mxu0 0.0
        %1357 = vmatprep.subr.mxu0 0.0
        %1358 = vmatpush1.msra.mxu0 0.0
        %1359 = vmatprep.subr.mxu0 0.0
        %1360 = vmatpush1.msra.mxu0 0.0
        %1361 = vmatprep.subr.mxu0 0.0
        %1362 = vmatpush1.msra.mxu0 0.0
        %1363 = vmatprep.subr.mxu0 0.0
        %1364 = vmatpush1.msra.mxu0 0.0
        %1365 = vmatprep.subr.mxu0 0.0
        %1366 = vmatpush1.msra.mxu0 0.0
        %1367 = vmatprep.subr.mxu0 0.0
        %1368 = vmatpush1.msra.mxu0 0.0
        %1369 = vmatprep.subr.mxu0 0.0
        %1370 = vmatpush1.msra.mxu0 0.0
        %1371 = vmatprep.subr.mxu0 0.0
        %1372 = vmatpush1.msra.mxu0 0.0
        %1373 = vmatprep.subr.mxu0 0.0
        %1374 = vmatpush1.msra.mxu0 0.0
        %1375 = vmatprep.subr.mxu0 0.0
        %1376 = vmatpush1.msra.mxu0 0.0
        %1377 = vmatprep.mubr.f32.mxu0 0.0
        %1378 = vmatmul.mubr.f32.gmra.mrb[0].mxu0 %v1311
        %v1379 = vpop.f32.mrb[0].mxu0
        %v1380 = vadd.f32 0.0, %v1379
        %v1381 = vpop.f32.mrb[0].mxu0
        %1382 = vdwg.mxu0
        %v1383 = vadd.f32 %v508, %v1380
        %v1384 = vmul.f32 %v1383, %v1383
        %v1385 = vsel %vm510, %v1384, 0.0
        %1386 = vadd.xlane.f32.xlu0 %v1385
        %v1387 = vpop.xlane.xlu0 %1386
        %v1388 = vmul.f32 %v1387, %v514
        %v1389 = vadd.f32 %v1388, 1e-05
        %v1390 = vrsqrt.pop %v1389
        %v1391 = vmul.f32 %v1383, %v1390
        %v1392 = vld [vmem:[%s2] sm:$0x1]
        %v1394 = vlaneseq
        %v1395 = vshrl.u32 %v1394, 7
        %v1396 = vsub.s32 0, %v1395
        %v1397 = vrot.slane %v1392, %v1396
        %v1399 = vmul.f32 %v1391, %v1397
        %v1400 = vld [vmem:[%s10] sm:$0xff]
        %v1401 = vld [vmem:[%s10 + $0x8] sm:$0xff]
        %v1402 = vld [vmem:[%s10 + $0x10] sm:$0xff]
        %v1403 = vld [vmem:[%s10 + $0x18] sm:$0xff]
        %v1405 = vsel %vm510, %v1399, 0
        %1407 = vmatprep.subr.mxu0 0.0
        %1408 = vmatpush1.msra.mxu0 %v1400
        %1409 = vmatprep.subr.mxu0 0.0
        %1410 = vmatpush1.msra.mxu0 %v1401
        %1411 = vmatprep.subr.mxu0 0.0
        %1412 = vmatpush1.msra.mxu0 %v1402
        %1413 = vmatprep.subr.mxu0 0.0
        %1414 = vmatpush1.msra.mxu0 %v1403
        %1415 = vmatprep.subr.mxu0 0.0
        %1416 = vmatpush1.msra.mxu0 0.0
        %1417 = vmatprep.subr.mxu0 0.0
        %1418 = vmatpush1.msra.mxu0 0.0
        %1419 = vmatprep.subr.mxu0 0.0
        %1420 = vmatpush1.msra.mxu0 0.0
        %1421 = vmatprep.subr.mxu0 0.0
        %1422 = vmatpush1.msra.mxu0 0.0
        %1423 = vmatprep.subr.mxu0 0.0
        %1424 = vmatpush1.msra.mxu0 0.0
        %1425 = vmatprep.subr.mxu0 0.0
        %1426 = vmatpush1.msra.mxu0 0.0
        %1427 = vmatprep.subr.mxu0 0.0
        %1428 = vmatpush1.msra.mxu0 0.0
        %1429 = vmatprep.subr.mxu0 0.0
        %1430 = vmatpush1.msra.mxu0 0.0
        %1431 = vmatprep.subr.mxu0 0.0
        %1432 = vmatpush1.msra.mxu0 0.0
        %1433 = vmatprep.subr.mxu0 0.0
        %1434 = vmatpush1.msra.mxu0 0.0
        %1435 = vmatprep.subr.mxu0 0.0
        %1436 = vmatpush1.msra.mxu0 0.0
        %1437 = vmatprep.subr.mxu0 0.0
        %1438 = vmatpush1.msra.mxu0 0.0
        %1439 = vmatprep.subr.mxu0 0.0
        %1440 = vmatpush1.msra.mxu0 0.0
        %1441 = vmatprep.subr.mxu0 0.0
        %1442 = vmatpush1.msra.mxu0 0.0
        %1443 = vmatprep.subr.mxu0 0.0
        %1444 = vmatpush1.msra.mxu0 0.0
        %1445 = vmatprep.subr.mxu0 0.0
        %1446 = vmatpush1.msra.mxu0 0.0
        %1447 = vmatprep.subr.mxu0 0.0
        %1448 = vmatpush1.msra.mxu0 0.0
        %1449 = vmatprep.subr.mxu0 0.0
        %1450 = vmatpush1.msra.mxu0 0.0
        %1451 = vmatprep.subr.mxu0 0.0
        %1452 = vmatpush1.msra.mxu0 0.0
        %1453 = vmatprep.subr.mxu0 0.0
        %1454 = vmatpush1.msra.mxu0 0.0
        %1455 = vmatprep.subr.mxu0 0.0
        %1456 = vmatpush1.msra.mxu0 0.0
        %1457 = vmatprep.subr.mxu0 0.0
        %1458 = vmatpush1.msra.mxu0 0.0
        %1459 = vmatprep.subr.mxu0 0.0
        %1460 = vmatpush1.msra.mxu0 0.0
        %1461 = vmatprep.subr.mxu0 0.0
        %1462 = vmatpush1.msra.mxu0 0.0
        %1463 = vmatprep.subr.mxu0 0.0
        %1464 = vmatpush1.msra.mxu0 0.0
        %1465 = vmatprep.subr.mxu0 0.0
        %1466 = vmatpush1.msra.mxu0 0.0
        %1467 = vmatprep.subr.mxu0 0.0
        %1468 = vmatpush1.msra.mxu0 0.0
        %1469 = vmatprep.subr.mxu0 0.0
        %1470 = vmatpush1.msra.mxu0 0.0
        %1471 = vmatprep.mubr.f32.mxu0 0.0
        %1472 = vmatmul.mubr.f32.gmra.mrb[0].mxu0 %v1405
        %v1473 = vpop.f32.mrb[0].mxu0
        %v1474 = vadd.f32 0.0, %v1473
        %v1475 = vpop.f32.mrb[0].mxu0
        %1476 = vdwg.mxu0
        %v1477 = vld [vmem:[#allocation10] sm:$0xff]
        %v1478 = vld [vmem:[#allocation10 + $0x8] sm:$0xff]
        %v1479 = vld [vmem:[#allocation10 + $0x10] sm:$0xff]
        %v1480 = vld [vmem:[#allocation10 + $0x18] sm:$0xff]
        %1481 = vmatprep.subr.mxu0 0.0
        %1482 = vmatpush1.msra.mxu0 %v1477
        %1483 = vmatprep.subr.mxu0 0.0
        %1484 = vmatpush1.msra.mxu0 %v1478
        %1485 = vmatprep.subr.mxu0 0.0
        %1486 = vmatpush1.msra.mxu0 %v1479
        %1487 = vmatprep.subr.mxu0 0.0
        %1488 = vmatpush1.msra.mxu0 %v1480
        %1489 = vmatprep.subr.mxu0 0.0
        %1490 = vmatpush1.msra.mxu0 0.0
        %1491 = vmatprep.subr.mxu0 0.0
        %1492 = vmatpush1.msra.mxu0 0.0
        %1493 = vmatprep.subr.mxu0 0.0
        %1494 = vmatpush1.msra.mxu0 0.0
        %1495 = vmatprep.subr.mxu0 0.0
        %1496 = vmatpush1.msra.mxu0 0.0
        %1497 = vmatprep.subr.mxu0 0.0
        %1498 = vmatpush1.msra.mxu0 0.0
        %1499 = vmatprep.subr.mxu0 0.0
        %1500 = vmatpush1.msra.mxu0 0.0
        %1501 = vmatprep.subr.mxu0 0.0
        %1502 = vmatpush1.msra.mxu0 0.0
        %1503 = vmatprep.subr.mxu0 0.0
        %1504 = vmatpush1.msra.mxu0 0.0
        %1505 = vmatprep.subr.mxu0 0.0
        %1506 = vmatpush1.msra.mxu0 0.0
        %1507 = vmatprep.subr.mxu0 0.0
        %1508 = vmatpush1.msra.mxu0 0.0
        %1509 = vmatprep.subr.mxu0 0.0
        %1510 = vmatpush1.msra.mxu0 0.0
        %1511 = vmatprep.subr.mxu0 0.0
        %1512 = vmatpush1.msra.mxu0 0.0
        %1513 = vmatprep.subr.mxu0 0.0
        %1514 = vmatpush1.msra.mxu0 0.0
        %1515 = vmatprep.subr.mxu0 0.0
        %1516 = vmatpush1.msra.mxu0 0.0
        %1517 = vmatprep.subr.mxu0 0.0
        %1518 = vmatpush1.msra.mxu0 0.0
        %1519 = vmatprep.subr.mxu0 0.0
        %1520 = vmatpush1.msra.mxu0 0.0
        %1521 = vmatprep.subr.mxu0 0.0
        %1522 = vmatpush1.msra.mxu0 0.0
        %1523 = vmatprep.subr.mxu0 0.0
        %1524 = vmatpush1.msra.mxu0 0.0
        %1525 = vmatprep.subr.mxu0 0.0
        %1526 = vmatpush1.msra.mxu0 0.0
        %1527 = vmatprep.subr.mxu0 0.0
        %1528 = vmatpush1.msra.mxu0 0.0
        %1529 = vmatprep.subr.mxu0 0.0
        %1530 = vmatpush1.msra.mxu0 0.0
        %1531 = vmatprep.subr.mxu0 0.0
        %1532 = vmatpush1.msra.mxu0 0.0
        %1533 = vmatprep.subr.mxu0 0.0
        %1534 = vmatpush1.msra.mxu0 0.0
        %1535 = vmatprep.subr.mxu0 0.0
        %1536 = vmatpush1.msra.mxu0 0.0
        %1537 = vmatprep.subr.mxu0 0.0
        %1538 = vmatpush1.msra.mxu0 0.0
        %1539 = vmatprep.subr.mxu0 0.0
        %1540 = vmatpush1.msra.mxu0 0.0
        %1541 = vmatprep.subr.mxu0 0.0
        %1542 = vmatpush1.msra.mxu0 0.0
        %1543 = vmatprep.subr.mxu0 0.0
        %1544 = vmatpush1.msra.mxu0 0.0
        %1545 = vmatprep.mubr.f32.mxu0 0.0
        %1546 = vmatmul.mubr.f32.gmra.mrb[0].mxu0 %v1405
        %v1547 = vpop.f32.mrb[0].mxu0
        %v1548 = vadd.f32 0.0, %v1547
        %v1549 = vpop.f32.mrb[0].mxu0
        %1550 = vdwg.mxu0
        %v1551 = vxor.u32 %v1474, 2147483648
        %v1552 = vmul.f32 %v1551, 1.442695
        %v1553 = vpow.pop %v1552
        %v1554 = vadd.f32 %v1553, 1.0
        %v1555 = vrcp.pop %v1554
        %v1556 = vmul.f32 1.0, %v1555
        %v1557 = vmul.f32 %v1474, %v1556
        %v1558 = vmul.f32 %v1557, %v1548
        %v1559 = vld [vmem:[%s12] sm:$0xff]
        %v1560 = vld [vmem:[%s12 + $0x8] sm:$0xff]
        %v1561 = vld [vmem:[%s12 + $0x10] sm:$0xff]
        %v1562 = vld [vmem:[%s12 + $0x18] sm:$0xff]
        %v1563 = vld [vmem:[%s12 + $0x20] sm:$0xff]
        %v1564 = vld [vmem:[%s12 + $0x28] sm:$0xff]
        %v1565 = vld [vmem:[%s12 + $0x30] sm:$0xff]
        %v1566 = vld [vmem:[%s12 + $0x38] sm:$0xff]
        %vm1567 = vcmask 523264
        %v1569 = vsel %vm1567, %v1558, 0
        %1571 = vmatprep.subr.mxu0 0.0
        %1572 = vmatpush1.msra.mxu0 %v1559
        %1573 = vmatprep.subr.mxu0 0.0
        %1574 = vmatpush1.msra.mxu0 %v1560
        %1575 = vmatprep.subr.mxu0 0.0
        %1576 = vmatpush1.msra.mxu0 %v1561
        %1577 = vmatprep.subr.mxu0 0.0
        %1578 = vmatpush1.msra.mxu0 %v1562
        %1579 = vmatprep.subr.mxu0 0.0
        %1580 = vmatpush1.msra.mxu0 %v1563
        %1581 = vmatprep.subr.mxu0 0.0
        %1582 = vmatpush1.msra.mxu0 %v1564
        %1583 = vmatprep.subr.mxu0 0.0
        %1584 = vmatpush1.msra.mxu0 %v1565
        %1585 = vmatprep.subr.mxu0 0.0
        %1586 = vmatpush1.msra.mxu0 %v1566
        %1587 = vmatprep.subr.mxu0 0.0
        %1588 = vmatpush1.msra.mxu0 0.0
        %1589 = vmatprep.subr.mxu0 0.0
        %1590 = vmatpush1.msra.mxu0 0.0
        %1591 = vmatprep.subr.mxu0 0.0
        %1592 = vmatpush1.msra.mxu0 0.0
        %1593 = vmatprep.subr.mxu0 0.0
        %1594 = vmatpush1.msra.mxu0 0.0
        %1595 = vmatprep.subr.mxu0 0.0
        %1596 = vmatpush1.msra.mxu0 0.0
        %1597 = vmatprep.subr.mxu0 0.0
        %1598 = vmatpush1.msra.mxu0 0.0
        %1599 = vmatprep.subr.mxu0 0.0
        %1600 = vmatpush1.msra.mxu0 0.0
        %1601 = vmatprep.subr.mxu0 0.0
        %1602 = vmatpush1.msra.mxu0 0.0
        %1603 = vmatprep.subr.mxu0 0.0
        %1604 = vmatpush1.msra.mxu0 0.0
        %1605 = vmatprep.subr.mxu0 0.0
        %1606 = vmatpush1.msra.mxu0 0.0
        %1607 = vmatprep.subr.mxu0 0.0
        %1608 = vmatpush1.msra.mxu0 0.0
        %1609 = vmatprep.subr.mxu0 0.0
        %1610 = vmatpush1.msra.mxu0 0.0
        %1611 = vmatprep.subr.mxu0 0.0
        %1612 = vmatpush1.msra.mxu0 0.0
        %1613 = vmatprep.subr.mxu0 0.0
        %1614 = vmatpush1.msra.mxu0 0.0
        %1615 = vmatprep.subr.mxu0 0.0
        %1616 = vmatpush1.msra.mxu0 0.0
        %1617 = vmatprep.subr.mxu0 0.0
        %1618 = vmatpush1.msra.mxu0 0.0
        %1619 = vmatprep.subr.mxu0 0.0
        %1620 = vmatpush1.msra.mxu0 0.0
        %1621 = vmatprep.subr.mxu0 0.0
        %1622 = vmatpush1.msra.mxu0 0.0
        %1623 = vmatprep.subr.mxu0 0.0
        %1624 = vmatpush1.msra.mxu0 0.0
        %1625 = vmatprep.subr.mxu0 0.0
        %1626 = vmatpush1.msra.mxu0 0.0
        %1627 = vmatprep.subr.mxu0 0.0
        %1628 = vmatpush1.msra.mxu0 0.0
        %1629 = vmatprep.subr.mxu0 0.0
        %1630 = vmatpush1.msra.mxu0 0.0
        %1631 = vmatprep.subr.mxu0 0.0
        %1632 = vmatpush1.msra.mxu0 0.0
        %1633 = vmatprep.subr.mxu0 0.0
        %1634 = vmatpush1.msra.mxu0 0.0
        %1635 = vmatprep.mubr.f32.mxu0 0.0
        %1636 = vmatmul.mubr.f32.gmra.mrb[0].mxu0 %v1569
        %v1637 = vpop.f32.mrb[0].mxu0
        %v1638 = vadd.f32 0.0, %v1637
        %v1639 = vpop.f32.mrb[0].mxu0
        %1640 = vdwg.mxu0
        %v1641 = vadd.f32 %v1383, %v1638
        %v1642 = vsel %vm510, %v1641, %v641
        %1643 = vst.msk [vmem:[%s507] sm:$0xff] %vm1567, %v1642
        %s1644 = sand.u32 %s318, 1
        %s1645 = scalar_lea.sflag [#allocation4], %s1644
        %s1646 = sand.u32 %s318, 1
        %s1647 = smul.addr %s1646, 8
        %s1648 = scalar_lea.vmem [#allocation11], %s1647
        // Predicated region
        $region93: #{tpu_custom_call.1} parent=71 // pred_check
          %p1649 = pneg %p328
        $region94: #{tpu_custom_call.1} parent=71 // pred_check_branch
          %1651 = sbr.rel (%p1649) target = $region96
        $region95: #{tpu_custom_call.1} parent=71 // pred_region
          %s1653 = ssub.s32 128, 128
          %1654 = vsyncadd %s1645, %s1653
          %s1655 = smul.addr %s32, 128
          %s1656 = scalar_lea.hbm %s13, %s1655
          %s1658 = sshll.u32 %s1648, 4
          %s1659 = int_to_ptr.vmem [resolvable:$true] %s1658
          %1661 = dma.vmem_to_hbm [thread:$0]  %s1659, 128, %s1656, %s1645
        $region96: #{tpu_custom_call.1} parent=71 // pred_fallthru
          _
      $region72: #{tpu_custom_call.1} parent=5 // pred_fallthru
        _
      %p1662 = scmp.le.s32.totalorder 2, %s27
      // Predicated region
      $region97: #{tpu_custom_call.1} parent=5 // pred_check
        %p1663 = pneg %p1662
      $region98: #{tpu_custom_call.1} parent=5 // pred_check_branch
        %1665 = sbr.rel (%p1663) target = $region100
      $region99: #{tpu_custom_call.1} parent=5 // pred_region
        %s1666 = ssub.s32 %s27, 2
        // Predicated region
        $region101: #{tpu_custom_call.1} parent=99 // pred_check
          %p1667 = pneg %p334
        $region102: #{tpu_custom_call.1} parent=99 // pred_check_branch
          %1669 = sbr.rel (%p1667) target = $region104
        $region103: #{tpu_custom_call.1} parent=99 // pred_region
          %s1670 = sand.u32 %s319, 1
          %s1671 = scalar_lea.sflag [#allocation4], %s1670
          %s1672 = sand.u32 %s319, 1
          %s1673 = smul.addr %s1672, 8
          %s1674 = scalar_lea.vmem [#allocation11], %s1673
          %1675 = dma.done %s1671, 128
        $region104: #{tpu_custom_call.1} parent=99 // pred_fallthru
          _
      $region100: #{tpu_custom_call.1} parent=5 // pred_fallthru
        _
    $region6: #{tpu_custom_call.1} parent=1 // loop_footer
      %s31 = sadd.s32 1, %s27
    $region7: #{tpu_custom_call.1} parent=1 // loop_footer_branch
      %26 = sbr.rel target = $region3
    $region8: #{tpu_custom_call.1} parent=1 // loop_exit
      _
    %1676 = vsyncpa [#allocation3], 1
    %s1677 = scalar_lea.sflag [#allocation3], 1
    %1678 = vsyncpa %s1677, 1
    %1679 = vsyncpa [#allocation6], 1
    %1680 = vsyncpa [#allocation9], 1
    %1681 = vsyncpa [#allocation4], 1
    %s1682 = scalar_lea.sflag [#allocation4], 1
    %1683 = vsyncpa %s1682, 1

</llo_original>
